<compile_context>
chip_gen: v7x
topology: tpu7x:2x2x1
jax: 0.10.0
libtpu: 0.0.40
codegen_flags: <defaults>
</compile_context>

<pallas_src>
import functools
import math

import jax
import jax.numpy as jnp
from jax import lax
from jax.experimental import pallas as pl
from jax.experimental.pallas import tpu as pltpu

# Contract the last dim of both operands: A(m,k) x B(n,k) -> (m,n), i.e. A @ B^T
_NT_DIMS = (((1,), (1,)), ((), ()))
# Standard contraction: A(m,k) x B(k,n) -> (m,n)
_NN_DIMS = (((1,), (0,)), ((), ()))


def _fused_attention_kernel(x_ref, y_ref, wk_ref, z_ref, wv_ref, o_ref, *,
                            scale, mxu_dtype, precision):
    """Single-step fused kernel: K/V projections + scaled-dot-product attention.

    x_ref : (M, H)            flattened queries, M = B * Sq
    y_ref : (Sk, key_size)
    wk_ref: (H, key_size)     PyTorch nn.Linear weight layout (out, in)
    z_ref : (Sv, value_size)
    wv_ref: (256, value_size) PyTorch nn.Linear weight layout (out, in)
    o_ref : (M, 256)          lane-dense output (unmasked vst)
    """
    if mxu_dtype is not None:
        cast = lambda a: a.astype(mxu_dtype)   # bf16 MXU operands (production lever)
    else:
        cast = lambda a: a                     # f32 operands, HIGHEST precision (parity)

    # Projections — computed exactly once (single collapsed grid step).  NT
    # dot_general consumes the torch (out, in) weight layout without W^T copies.
    k = lax.dot_general(cast(y_ref[...]), cast(wk_ref[...]), _NT_DIMS,
                        precision=precision,
                        preferred_element_type=jnp.float32)            # (Sk, H)
    v = lax.dot_general(cast(z_ref[...]), cast(wv_ref[...]), _NT_DIMS,
                        precision=precision,
                        preferred_element_type=jnp.float32)            # (Sv, 256)

    # Fold 1/sqrt(H) into the Q load (fuses with the cast; avoids a VPU pass
    # over the (M, Sk) scores tile when Sk >> H at production sizes).
    q = x_ref[...].astype(jnp.float32) * scale                          # (M, H)

    # scores = (Q/sqrt(H)) K^T — NT form again: contract over H, no k.T copy.
    s = lax.dot_general(cast(q), cast(k), _NT_DIMS,
                        precision=precision,
                        preferred_element_type=jnp.float32)             # (M, Sk)

    # Numerically-stable softmax, all in f32 (v5e VPU/EUP has no bf16 anyway).
    # Exact normalization: the divide is off the critical path and keeps
    # bit-level parity with the reference (approx vrcp caused the prior drift).
    m = jnp.max(s, axis=-1, keepdims=True)
    p = jnp.exp(s - m)
    p = p / jnp.sum(p, axis=-1, keepdims=True)

    # out = softmax @ V   (dropout is identity in eval mode)
    o_ref[...] = lax.dot_general(cast(p), cast(v), _NN_DIMS,
                                 precision=precision,
                                 preferred_element_type=jnp.float32
                                 ).astype(o_ref.dtype)


def top_extra_attention(X, Y, Z, W_k, W_v, *, rate=None, mxu_dtype=None):
    """Pallas implementation of TopExtraAttention.forward (eval mode).

    X  : (B, Sq, H)        queries (used as-is; W_q is never applied in forward)
    Y  : (Sk, key_size)
    Z  : (Sv, value_size)
    W_k: (H, key_size)     PyTorch nn.Linear weight layout (out, in)
    W_v: (256, value_size) PyTorch nn.Linear weight layout (out, in)
    rate is accepted for signature parity; the torch forward never uses it.
    mxu_dtype: None (f32, HIGHEST precision — reference parity) or jnp.bfloat16
               (bf16 MXU operands, f32 accumulation — production throughput).
    """
    del rate
    B, Sq, H = X.shape
    Sk, key_size = Y.shape
    Sv, value_size = Z.shape
    Vo = W_v.shape[0]  # 256
    assert Sk == Sv, "matmul(softmax, value) requires Sk == Sv"
    assert W_k.shape == (H, key_size)

    M = B * Sq
    X2 = X.reshape(M, H)  # contiguous reshape: metadata-only, no copy

    scale = 1.0 / math.sqrt(float(H))
    # f32 operands -> request f32-faithful MXU passes; bf16 operands are native.
    precision = lax.Precision.HIGHEST if mxu_dtype is None else lax.Precision.DEFAULT

    kernel = functools.partial(_fused_attention_kernel, scale=scale,
                               mxu_dtype=mxu_dtype, precision=precision)

    itemsize = 4
    cost = pl.CostEstimate(
        flops=2 * (Sk * key_size * H        # K projection
                   + Sv * value_size * Vo   # V projection
                   + M * H * Sk             # Q K^T
                   + M * Sk * Vo),          # P V
        transcendentals=M * Sk,             # exp in softmax
        bytes_accessed=itemsize * (M * H + Sk * key_size + H * key_size
                                   + Sv * value_size + Vo * value_size + M * Vo),
    )

    out2 = pl.pallas_call(
        kernel,
        out_shape=jax.ShapeDtypeStruct((M, Vo), jnp.float32),
        grid_spec=pltpu.PrefetchScalarGridSpec(
            num_scalar_prefetch=0,
            grid=(1,),  # fully collapsed: one step, everything resident in VMEM
            in_specs=[
                pl.BlockSpec((M, H), lambda i: (0, 0)),             # X (flattened)
                pl.BlockSpec((Sk, key_size), lambda i: (0, 0)),     # Y
                pl.BlockSpec((H, key_size), lambda i: (0, 0)),      # W_k (out, in)
                pl.BlockSpec((Sv, value_size), lambda i: (0, 0)),   # Z
                pl.BlockSpec((Vo, value_size), lambda i: (0, 0)),   # W_v (out, in)
            ],
            out_specs=pl.BlockSpec((M, Vo), lambda i: (0, 0)),      # lane-dense 256
        ),
        compiler_params=pltpu.CompilerParams(
            dimension_semantics=("arbitrary",)),
        cost_estimate=cost,
    )(X2, Y, W_k, Z, W_v)

    return out2.reshape(B, Sq, Vo)


def _reference(X, Y, Z, W_k, W_v):
    """Pure-JAX reference mirroring the torch forward (dropout = identity).

    Uses HIGHEST matmul precision so the f32 reference is not silently run with
    bf16 MXU passes (the source of the previous parity failure).
    """
    hi = lax.Precision.HIGHEST
    key = jnp.matmul(Y, W_k.T, precision=hi)[None]        # (1, Sk, H)
    value = jnp.matmul(Z, W_v.T, precision=hi)[None]      # (1, Sv, 256)
    out = jnp.matmul(X, jnp.swapaxes(key, 1, 2), precision=hi) / math.sqrt(X.shape[-1])
    out = jax.nn.softmax(out, axis=-1)
    return jnp.matmul(out, value, precision=hi)


if __name__ == "__main__":
    # Module hyper-params (small, consistent with the forward pass).
    query_size = 32      # W_q is unused in forward
    key_size = 32
    value_size = 32
    num_hiddens = 32
    num_heads = 4        # unused in forward

    B, Sq, Sk, Sv = 2, 8, 8, 8

    key0 = jax.random.PRNGKey(0)
    k_x, k_y, k_z, k_wq, k_wk, k_wv, k_wo = jax.random.split(key0, 7)

    # Deterministic parameter init (PyTorch nn.Linear weight layout: (out, in)).
    W_q = jax.random.normal(k_wq, (num_hiddens, query_size), jnp.float32) * 0.1  # unused
    W_k = jax.random.normal(k_wk, (num_hiddens, key_size), jnp.float32) * 0.1
    W_v = jax.random.normal(k_wv, (256, value_size), jnp.float32) * 0.1
    W_o = jax.random.normal(k_wo, (100, num_hiddens), jnp.float32) * 0.1          # unused

    # Inputs.
    X = jax.random.normal(k_x, (B, Sq, num_hiddens), jnp.float32)
    Y = jax.random.normal(k_y, (Sk, key_size), jnp.float32)
    Z = jax.random.normal(k_z, (Sv, value_size), jnp.float32)
    rate = 0.2  # passed to forward but unused by the torch module

    # TODO(synk): nn.Dropout is stochastic in train mode; implemented as identity (eval mode).
    out = top_extra_attention(X, Y, Z, W_k, W_v, rate=rate)
    out = jax.block_until_ready(out)

    ref = _reference(X, Y, Z, W_k, W_v)
    assert out.shape == (B, Sq, 256), out.shape
    assert jnp.allclose(out, ref, atol=2e-3, rtol=2e-3), "mismatch vs reference"

    # Production lever from the perf review: bf16 MXU operands, f32 accumulation
    # and f32 softmax.  Loose tolerance — this path trades exact parity for MXU
    # throughput at production sizes.
    out_bf16 = top_extra_attention(X, Y, Z, W_k, W_v, rate=rate, mxu_dtype=jnp.bfloat16)
    out_bf16 = jax.block_until_ready(out_bf16)
    assert out_bf16.shape == (B, Sq, 256), out_bf16.shape
    assert jnp.allclose(out_bf16, ref, atol=1e-1, rtol=1e-1), "bf16 MXU path mismatch"

    print("KERNEL_OK")
</pallas_src>

<mosaic_0001>
module attributes {stable_mosaic.version = 11 : i64} {
  func.func @_fused_attention_kernel(%arg0: i32, %arg1: memref<16x32xf32, #tpu.memory_space<vmem>>, %arg2: memref<8x32xf32, #tpu.memory_space<vmem>>, %arg3: memref<32x32xf32, #tpu.memory_space<vmem>>, %arg4: memref<8x32xf32, #tpu.memory_space<vmem>>, %arg5: memref<256x32xf32, #tpu.memory_space<vmem>>, %arg6: memref<16x256xf32, #tpu.memory_space<vmem>>) attributes {dimension_semantics = [#tpu.dimension_semantics<arbitrary>], iteration_bounds = array<i64: 1>, scalar_prefetch = 0 : i64, scratch_operands = 0 : i64, tpu.core_type = #tpu.core_type<tc>, window_params = [{pipeline_mode = #tpu.pipeline_mode<synchronous>, transform_indices = @transform_0, window_bounds = array<i64: 16, 32>}, {pipeline_mode = #tpu.pipeline_mode<synchronous>, transform_indices = @transform_1, window_bounds = array<i64: 8, 32>}, {pipeline_mode = #tpu.pipeline_mode<synchronous>, transform_indices = @transform_2, window_bounds = array<i64: 32, 32>}, {pipeline_mode = #tpu.pipeline_mode<synchronous>, transform_indices = @transform_3, window_bounds = array<i64: 8, 32>}, {pipeline_mode = #tpu.pipeline_mode<synchronous>, transform_indices = @transform_4, window_bounds = array<i64: 256, 32>}, {pipeline_mode = #tpu.pipeline_mode<synchronous>, transform_indices = @transform_5, window_bounds = array<i64: 16, 256>}]} {
    %c0 = arith.constant 0 : index
    %c0_0 = arith.constant 0 : index
    %0 = vector.load %arg2[%c0, %c0_0] : memref<8x32xf32, #tpu.memory_space<vmem>>, vector<8x32xf32>
    %c0_1 = arith.constant 0 : index
    %c0_2 = arith.constant 0 : index
    %1 = vector.load %arg3[%c0_1, %c0_2] : memref<32x32xf32, #tpu.memory_space<vmem>>, vector<32x32xf32>
    %cst = arith.constant dense<0.000000e+00> : vector<8x32xf32>
    %2 = tpu.matmul %0, %1, %cst {dimension_numbers = #tpu.dot_dimension_numbers<[1], [1], [0], [0], [0, 0, 1, 0], [], []>, precision = #tpu.contract_precision<fp32>} : vector<8x32xf32>, vector<32x32xf32>, vector<8x32xf32> -> vector<8x32xf32>
    %c0_3 = arith.constant 0 : index
    %c0_4 = arith.constant 0 : index
    %3 = vector.load %arg4[%c0_3, %c0_4] : memref<8x32xf32, #tpu.memory_space<vmem>>, vector<8x32xf32>
    %c0_5 = arith.constant 0 : index
    %c0_6 = arith.constant 0 : index
    %4 = vector.load %arg5[%c0_5, %c0_6] : memref<256x32xf32, #tpu.memory_space<vmem>>, vector<256x32xf32>
    %cst_7 = arith.constant dense<0.000000e+00> : vector<8x256xf32>
    %5 = tpu.matmul %3, %4, %cst_7 {dimension_numbers = #tpu.dot_dimension_numbers<[1], [1], [0], [0], [0, 0, 1, 0], [], []>, precision = #tpu.contract_precision<fp32>} : vector<8x32xf32>, vector<256x32xf32>, vector<8x256xf32> -> vector<8x256xf32>
    %c0_8 = arith.constant 0 : index
    %c0_9 = arith.constant 0 : index
    %6 = vector.load %arg1[%c0_8, %c0_9] : memref<16x32xf32, #tpu.memory_space<vmem>>, vector<16x32xf32>
    %cst_10 = arith.constant 0.176776692 : f32
    %7 = vector.broadcast %cst_10 : f32 to vector<16x32xf32>
    %8 = arith.mulf %6, %7 : vector<16x32xf32>
    %cst_11 = arith.constant dense<0.000000e+00> : vector<16x8xf32>
    %9 = tpu.matmul %8, %2, %cst_11 {dimension_numbers = #tpu.dot_dimension_numbers<[1], [1], [0], [0], [0, 0, 1, 0], [], []>, precision = #tpu.contract_precision<fp32>} : vector<16x32xf32>, vector<8x32xf32>, vector<16x8xf32> -> vector<16x8xf32>
    %cst_12 = arith.constant dense<0xFF800000> : vector<16xf32>
    %10 = vector.multi_reduction <maximumf>, %9, %cst_12 [1] : vector<16x8xf32> to vector<16xf32>
    %11 = vector.shape_cast %10 : vector<16xf32> to vector<16x1xf32>
    %12 = vector.broadcast %11 : vector<16x1xf32> to vector<16x8xf32>
    %13 = arith.subf %9, %12 : vector<16x8xf32>
    %14 = math.exp %13 : vector<16x8xf32>
    %cst_13 = arith.constant dense<0.000000e+00> : vector<16xf32>
    %15 = vector.multi_reduction <add>, %14, %cst_13 [1] : vector<16x8xf32> to vector<16xf32>
    %16 = vector.shape_cast %15 : vector<16xf32> to vector<16x1xf32>
    %17 = vector.broadcast %16 : vector<16x1xf32> to vector<16x8xf32>
    %18 = arith.divf %14, %17 : vector<16x8xf32>
    %cst_14 = arith.constant dense<0.000000e+00> : vector<16x256xf32>
    %19 = tpu.matmul %18, %5, %cst_14 {dimension_numbers = #tpu.dot_dimension_numbers<[1], [0], [0], [1], [0, 0, 1, 1], [], []>, precision = #tpu.contract_precision<fp32>} : vector<16x8xf32>, vector<8x256xf32>, vector<16x256xf32> -> vector<16x256xf32>
    %c0_15 = arith.constant 0 : index
    %c0_16 = arith.constant 0 : index
    %20 = vector.load %arg6[%c0_15, %c0_16] : memref<16x256xf32, #tpu.memory_space<vmem>>, vector<16x256xf32>
    tpu.vector_store %arg6[%c0_15, %c0_16], %19 {strides = array<i32>} : memref<16x256xf32, #tpu.memory_space<vmem>>, vector<16x256xf32>,
    return
  }
  func.func @transform_0(%arg0: i32) -> (i32, i32) {
    %c0_i32 = arith.constant 0 : i32
    %c0_i32_0 = arith.constant 0 : i32
    %c0_i32_1 = arith.constant 0 : i32
    return %c0_i32, %c0_i32_0 : i32, i32
  }
  func.func @transform_1(%arg0: i32) -> (i32, i32) {
    %c0_i32 = arith.constant 0 : i32
    %c0_i32_0 = arith.constant 0 : i32
    %c0_i32_1 = arith.constant 0 : i32
    return %c0_i32, %c0_i32_0 : i32, i32
  }
  func.func @transform_2(%arg0: i32) -> (i32, i32) {
    %c0_i32 = arith.constant 0 : i32
    %c0_i32_0 = arith.constant 0 : i32
    %c0_i32_1 = arith.constant 0 : i32
    return %c0_i32, %c0_i32_0 : i32, i32
  }
  func.func @transform_3(%arg0: i32) -> (i32, i32) {
    %c0_i32 = arith.constant 0 : i32
    %c0_i32_0 = arith.constant 0 : i32
    %c0_i32_1 = arith.constant 0 : i32
    return %c0_i32, %c0_i32_0 : i32, i32
  }
  func.func @transform_4(%arg0: i32) -> (i32, i32) {
    %c0_i32 = arith.constant 0 : i32
    %c0_i32_0 = arith.constant 0 : i32
    %c0_i32_1 = arith.constant 0 : i32
    return %c0_i32, %c0_i32_0 : i32, i32
  }
  func.func @transform_5(%arg0: i32) -> (i32, i32) {
    %c0_i32 = arith.constant 0 : i32
    %c0_i32_0 = arith.constant 0 : i32
    %c0_i32_1 = arith.constant 0 : i32
    return %c0_i32, %c0_i32_0 : i32, i32
  }
}

</mosaic_0001>

<llo_original>
// kernel: tpu_custom_call.1
$region0: #{tpu_custom_call.1}
  #allocation0 [shape = 'u32[]', space=smem, size = 0x4, offset = 0x4, fixed_abs, tag = 'smem constant byte address 0x4 - core index']
  #allocation1 [shape = 'u32[144,128]{1,0:T(1,128)}', space=vmem, size = 0x12000, scoped, tag = 'internal scratch']
  %s0 = inlined_call_operand.vmem [shape: f32[16,32], index: 0, kind: input, shape index: {}]
  %s1 = inlined_call_operand.vmem [shape: f32[8,32], index: 1, kind: input, shape index: {}]
  %s2 = inlined_call_operand.vmem [shape: f32[32,32], index: 2, kind: input, shape index: {}]
  %s3 = inlined_call_operand.vmem [shape: f32[8,32], index: 3, kind: input, shape index: {}]
  %s4 = inlined_call_operand.vmem [shape: f32[256,32], index: 4, kind: input, shape index: {}]
  %s5 = inlined_call_operand.hbm [shape: f32[16,256], index: 5, kind: output, shape index: {}]
  %s6 = sld [smem:[#allocation0]]
  $region30: #{tpu_custom_call.1} parent=0
    _
  %s8 = ssub.s32 1, %s6
  %s9 = scalar_select 0, %s8, %s6
  $region1: #{tpu_custom_call.1} parent=0
    #allocation2 [shape = 'u8[16384]{0}', space=vmem, size = 0x4000, scoped, tag = 'output window, operand 0, single buffered']
    #allocation3 [shape = 's32[1]{0}', space=sflag, size = 0x4, scoped, tag = 'scoped memory for tpu_custom_call.1']
    %10 = vsyncpa [#allocation3], 0
    // Predicated region
    $region2: #{tpu_custom_call.1} parent=1 // pred_check
      _
    $region3: #{tpu_custom_call.1} parent=1 // pred_check_branch
      %12 = sbr.rel (0) target = $region5
    $region4: #{tpu_custom_call.1} parent=1 // pred_region
      _
    $region5: #{tpu_custom_call.1} parent=1 // pred_fallthru
      _
    // Predicated region
    $region6: #{tpu_custom_call.1} parent=1 // pred_check
      _
    $region7: #{tpu_custom_call.1} parent=1 // pred_check_branch
      %14 = sbr.rel (0) target = $region9
    $region8: #{tpu_custom_call.1} parent=1 // pred_region
      _
    $region9: #{tpu_custom_call.1} parent=1 // pred_fallthru
      _
    // Predicated region
    $region10: #{tpu_custom_call.1} parent=1 // pred_check
      _
    $region11: #{tpu_custom_call.1} parent=1 // pred_check_branch
      %16 = sbr.rel (0) target = $region13
    $region12: #{tpu_custom_call.1} parent=1 // pred_region
      _
    $region13: #{tpu_custom_call.1} parent=1 // pred_fallthru
      _
    // Predicated region
    $region14: #{tpu_custom_call.1} parent=1 // pred_check
      _
    $region15: #{tpu_custom_call.1} parent=1 // pred_check_branch
      %18 = sbr.rel (0) target = $region17
    $region16: #{tpu_custom_call.1} parent=1 // pred_region
      _
    $region17: #{tpu_custom_call.1} parent=1 // pred_fallthru
      _
    // Predicated region
    $region18: #{tpu_custom_call.1} parent=1 // pred_check
      _
    $region19: #{tpu_custom_call.1} parent=1 // pred_check_branch
      %20 = sbr.rel (0) target = $region21
    $region20: #{tpu_custom_call.1} parent=1 // pred_region
      _
    $region21: #{tpu_custom_call.1} parent=1 // pred_fallthru
      _
    %v21 = vld [vmem:[%s1] sm:$0xff]
    %v22 = vld [vmem:[%s2] sm:$0xff]
    %v23 = vld [vmem:[%s2 + $0x8] sm:$0xff]
    %v24 = vld [vmem:[%s2 + $0x10] sm:$0xff]
    %v25 = vld [vmem:[%s2 + $0x18] sm:$0xff]
    %vm26 = vcmask 261120
    %v28 = vsel %vm26, %v21, 0
    %v31 = vsel %vm26, %v22, 0
    %v34 = vsel %vm26, %v23, 0
    %v37 = vsel %vm26, %v24, 0
    %v40 = vsel %vm26, %v25, 0
    %42 = vmatprep.subr.mxu0 0.0
    %v43 = vand.u32 %v31, 4294901760
    %44 = vmatpush1.xpose.msra.mxu0 %v43
    %45 = vmatprep.subr.mxu0 0.0
    %v46 = vand.u32 %v34, 4294901760
    %47 = vmatpush1.xpose.msra.mxu0 %v46
    %48 = vmatprep.subr.mxu0 0.0
    %v49 = vand.u32 %v37, 4294901760
    %50 = vmatpush1.xpose.msra.mxu0 %v49
    %51 = vmatprep.subr.mxu0 0.0
    %v52 = vand.u32 %v40, 4294901760
    %53 = vmatpush1.xpose.msra.mxu0 %v52
    %54 = vmatprep.subr.mxu0 0.0
    %55 = vmatpush1.xpose.msra.mxu0 0.0
    %56 = vmatprep.subr.mxu0 0.0
    %57 = vmatpush1.xpose.msra.mxu0 0.0
    %58 = vmatprep.subr.mxu0 0.0
    %59 = vmatpush1.xpose.msra.mxu0 0.0
    %60 = vmatprep.subr.mxu0 0.0
    %61 = vmatpush1.xpose.msra.mxu0 0.0
    %62 = vmatprep.subr.mxu0 0.0
    %63 = vmatpush1.xpose.msra.mxu0 0.0
    %64 = vmatprep.subr.mxu0 0.0
    %65 = vmatpush1.xpose.msra.mxu0 0.0
    %66 = vmatprep.subr.mxu0 0.0
    %67 = vmatpush1.xpose.msra.mxu0 0.0
    %68 = vmatprep.subr.mxu0 0.0
    %69 = vmatpush1.xpose.msra.mxu0 0.0
    %70 = vmatprep.subr.mxu0 0.0
    %71 = vmatpush1.xpose.msra.mxu0 0.0
    %72 = vmatprep.subr.mxu0 0.0
    %73 = vmatpush1.xpose.msra.mxu0 0.0
    %74 = vmatprep.subr.mxu0 0.0
    %75 = vmatpush1.xpose.msra.mxu0 0.0
    %76 = vmatprep.subr.mxu0 0.0
    %77 = vmatpush1.xpose.msra.mxu0 0.0
    %78 = vmatprep.subr.mxu0 0.0
    %79 = vmatpush1.xpose.msra.mxu0 0.0
    %80 = vmatprep.subr.mxu0 0.0
    %81 = vmatpush1.xpose.msra.mxu0 0.0
    %82 = vmatprep.subr.mxu0 0.0
    %83 = vmatpush1.xpose.msra.mxu0 0.0
    %84 = vmatprep.subr.mxu0 0.0
    %85 = vmatpush1.xpose.msra.mxu0 0.0
    %86 = vmatprep.subr.mxu0 0.0
    %87 = vmatpush1.xpose.msra.mxu0 0.0
    %88 = vmatprep.subr.mxu0 0.0
    %89 = vmatpush1.xpose.msra.mxu0 0.0
    %90 = vmatprep.subr.mxu0 0.0
    %91 = vmatpush1.xpose.msra.mxu0 0.0
    %92 = vmatprep.subr.mxu0 0.0
    %93 = vmatpush1.xpose.msra.mxu0 0.0
    %94 = vmatprep.subr.mxu0 0.0
    %95 = vmatpush1.xpose.msra.mxu0 0.0
    %96 = vmatprep.subr.mxu0 0.0
    %97 = vmatpush1.xpose.msra.mxu0 0.0
    %98 = vmatprep.subr.mxu0 0.0
    %99 = vmatpush1.xpose.msra.mxu0 0.0
    %100 = vmatprep.subr.mxu0 0.0
    %101 = vmatpush1.xpose.msra.mxu0 0.0
    %102 = vmatprep.subr.mxu0 0.0
    %103 = vmatpush1.xpose.msra.mxu0 0.0
    %104 = vmatprep.subr.mxu0 0.0
    %105 = vmatpush1.xpose.msra.mxu0 0.0
    %106 = vmatprep.subr.mxu0 0.0
    %107 = vmatpush1.xpose.msra.mxu0 0.0
    %108 = vmatprep.subr.mxu0 0.0
    %109 = vmatpush1.xpose.msra.mxu0 0.0
    %110 = vmatprep.mubr.f32.mxu0 0.0
    %v111 = vand.u32 %v28, 4294901760
    %v112 = vsub.f32 %v28, %v111
    %v113 = vand.u32 %v112, 4294901760
    %v114 = vsub.f32 %v112, %v113
    %v115 = vand.u32 %v114, 4294901760
    %116 = vmatmul.mubr.f32.gmra.mrb[0].mxu0 %v115
    %v117 = vpop.f32.mrb[0].mxu0
    %v118 = vadd.f32 0.0, %v117
    %v119 = vpop.f32.mrb[0].mxu0
    %120 = vdwg.mxu0
    %121 = vmatprep.subr.mxu0 0.0
    %v122 = vand.u32 %v31, 4294901760
    %v123 = vsub.f32 %v31, %v122
    %v124 = vand.u32 %v123, 4294901760
    %v125 = vsub.f32 %v123, %v124
    %v126 = vand.u32 %v125, 4294901760
    %127 = vmatpush1.xpose.msra.mxu0 %v126
    %128 = vmatprep.subr.mxu0 0.0
    %v129 = vand.u32 %v34, 4294901760
    %v130 = vsub.f32 %v34, %v129
    %v131 = vand.u32 %v130, 4294901760
    %v132 = vsub.f32 %v130, %v131
    %v133 = vand.u32 %v132, 4294901760
    %134 = vmatpush1.xpose.msra.mxu0 %v133
    %135 = vmatprep.subr.mxu0 0.0
    %v136 = vand.u32 %v37, 4294901760
    %v137 = vsub.f32 %v37, %v136
    %v138 = vand.u32 %v137, 4294901760
    %v139 = vsub.f32 %v137, %v138
    %v140 = vand.u32 %v139, 4294901760
    %141 = vmatpush1.xpose.msra.mxu0 %v140
    %142 = vmatprep.subr.mxu0 0.0
    %v143 = vand.u32 %v40, 4294901760
    %v144 = vsub.f32 %v40, %v143
    %v145 = vand.u32 %v144, 4294901760
    %v146 = vsub.f32 %v144, %v145
    %v147 = vand.u32 %v146, 4294901760
    %148 = vmatpush1.xpose.msra.mxu0 %v147
    %149 = vmatprep.subr.mxu0 0.0
    %150 = vmatpush1.xpose.msra.mxu0 0.0
    %151 = vmatprep.subr.mxu0 0.0
    %152 = vmatpush1.xpose.msra.mxu0 0.0
    %153 = vmatprep.subr.mxu0 0.0
    %154 = vmatpush1.xpose.msra.mxu0 0.0
    %155 = vmatprep.subr.mxu0 0.0
    %156 = vmatpush1.xpose.msra.mxu0 0.0
    %157 = vmatprep.subr.mxu0 0.0
    %158 = vmatpush1.xpose.msra.mxu0 0.0
    %159 = vmatprep.subr.mxu0 0.0
    %160 = vmatpush1.xpose.msra.mxu0 0.0
    %161 = vmatprep.subr.mxu0 0.0
    %162 = vmatpush1.xpose.msra.mxu0 0.0
    %163 = vmatprep.subr.mxu0 0.0
    %164 = vmatpush1.xpose.msra.mxu0 0.0
    %165 = vmatprep.subr.mxu0 0.0
    %166 = vmatpush1.xpose.msra.mxu0 0.0
    %167 = vmatprep.subr.mxu0 0.0
    %168 = vmatpush1.xpose.msra.mxu0 0.0
    %169 = vmatprep.subr.mxu0 0.0
    %170 = vmatpush1.xpose.msra.mxu0 0.0
    %171 = vmatprep.subr.mxu0 0.0
    %172 = vmatpush1.xpose.msra.mxu0 0.0
    %173 = vmatprep.subr.mxu0 0.0
    %174 = vmatpush1.xpose.msra.mxu0 0.0
    %175 = vmatprep.subr.mxu0 0.0
    %176 = vmatpush1.xpose.msra.mxu0 0.0
    %177 = vmatprep.subr.mxu0 0.0
    %178 = vmatpush1.xpose.msra.mxu0 0.0
    %179 = vmatprep.subr.mxu0 0.0
    %180 = vmatpush1.xpose.msra.mxu0 0.0
    %181 = vmatprep.subr.mxu0 0.0
    %182 = vmatpush1.xpose.msra.mxu0 0.0
    %183 = vmatprep.subr.mxu0 0.0
    %184 = vmatpush1.xpose.msra.mxu0 0.0
    %185 = vmatprep.subr.mxu0 0.0
    %186 = vmatpush1.xpose.msra.mxu0 0.0
    %187 = vmatprep.subr.mxu0 0.0
    %188 = vmatpush1.xpose.msra.mxu0 0.0
    %189 = vmatprep.subr.mxu0 0.0
    %190 = vmatpush1.xpose.msra.mxu0 0.0
    %191 = vmatprep.subr.mxu0 0.0
    %192 = vmatpush1.xpose.msra.mxu0 0.0
    %193 = vmatprep.subr.mxu0 0.0
    %194 = vmatpush1.xpose.msra.mxu0 0.0
    %195 = vmatprep.subr.mxu0 0.0
    %196 = vmatpush1.xpose.msra.mxu0 0.0
    %197 = vmatprep.subr.mxu0 0.0
    %198 = vmatpush1.xpose.msra.mxu0 0.0
    %199 = vmatprep.subr.mxu0 0.0
    %200 = vmatpush1.xpose.msra.mxu0 0.0
    %201 = vmatprep.subr.mxu0 0.0
    %202 = vmatpush1.xpose.msra.mxu0 0.0
    %203 = vmatprep.subr.mxu0 0.0
    %204 = vmatpush1.xpose.msra.mxu0 0.0
    %205 = vmatprep.mubr.f32.mxu0 0.0
    %v206 = vand.u32 %v28, 4294901760
    %207 = vmatmul.mubr.f32.gmra.mrb[0].mxu0 %v206
    %v208 = vpop.f32.mrb[0].mxu0
    %v209 = vadd.f32 %v118, %v208
    %v210 = vpop.f32.mrb[0].mxu0
    %211 = vdwg.mxu0
    %212 = vmatprep.subr.mxu0 0.0
    %v213 = vand.u32 %v31, 4294901760
    %v214 = vsub.f32 %v31, %v213
    %215 = vmatpush1.xpose.msra.mxu0 %v214
    %216 = vmatprep.subr.mxu0 0.0
    %v217 = vand.u32 %v34, 4294901760
    %v218 = vsub.f32 %v34, %v217
    %219 = vmatpush1.xpose.msra.mxu0 %v218
    %220 = vmatprep.subr.mxu0 0.0
    %v221 = vand.u32 %v37, 4294901760
    %v222 = vsub.f32 %v37, %v221
    %223 = vmatpush1.xpose.msra.mxu0 %v222
    %224 = vmatprep.subr.mxu0 0.0
    %v225 = vand.u32 %v40, 4294901760
    %v226 = vsub.f32 %v40, %v225
    %227 = vmatpush1.xpose.msra.mxu0 %v226
    %228 = vmatprep.subr.mxu0 0.0
    %229 = vmatpush1.xpose.msra.mxu0 0.0
    %230 = vmatprep.subr.mxu0 0.0
    %231 = vmatpush1.xpose.msra.mxu0 0.0
    %232 = vmatprep.subr.mxu0 0.0
    %233 = vmatpush1.xpose.msra.mxu0 0.0
    %234 = vmatprep.subr.mxu0 0.0
    %235 = vmatpush1.xpose.msra.mxu0 0.0
    %236 = vmatprep.subr.mxu0 0.0
    %237 = vmatpush1.xpose.msra.mxu0 0.0
    %238 = vmatprep.subr.mxu0 0.0
    %239 = vmatpush1.xpose.msra.mxu0 0.0
    %240 = vmatprep.subr.mxu0 0.0
    %241 = vmatpush1.xpose.msra.mxu0 0.0
    %242 = vmatprep.subr.mxu0 0.0
    %243 = vmatpush1.xpose.msra.mxu0 0.0
    %244 = vmatprep.subr.mxu0 0.0
    %245 = vmatpush1.xpose.msra.mxu0 0.0
    %246 = vmatprep.subr.mxu0 0.0
    %247 = vmatpush1.xpose.msra.mxu0 0.0
    %248 = vmatprep.subr.mxu0 0.0
    %249 = vmatpush1.xpose.msra.mxu0 0.0
    %250 = vmatprep.subr.mxu0 0.0
    %251 = vmatpush1.xpose.msra.mxu0 0.0
    %252 = vmatprep.subr.mxu0 0.0
    %253 = vmatpush1.xpose.msra.mxu0 0.0
    %254 = vmatprep.subr.mxu0 0.0
    %255 = vmatpush1.xpose.msra.mxu0 0.0
    %256 = vmatprep.subr.mxu0 0.0
    %257 = vmatpush1.xpose.msra.mxu0 0.0
    %258 = vmatprep.subr.mxu0 0.0
    %259 = vmatpush1.xpose.msra.mxu0 0.0
    %260 = vmatprep.subr.mxu0 0.0
    %261 = vmatpush1.xpose.msra.mxu0 0.0
    %262 = vmatprep.subr.mxu0 0.0
    %263 = vmatpush1.xpose.msra.mxu0 0.0
    %264 = vmatprep.subr.mxu0 0.0
    %265 = vmatpush1.xpose.msra.mxu0 0.0
    %266 = vmatprep.subr.mxu0 0.0
    %267 = vmatpush1.xpose.msra.mxu0 0.0
    %268 = vmatprep.subr.mxu0 0.0
    %269 = vmatpush1.xpose.msra.mxu0 0.0
    %270 = vmatprep.subr.mxu0 0.0
    %271 = vmatpush1.xpose.msra.mxu0 0.0
    %272 = vmatprep.subr.mxu0 0.0
    %273 = vmatpush1.xpose.msra.mxu0 0.0
    %274 = vmatprep.subr.mxu0 0.0
    %275 = vmatpush1.xpose.msra.mxu0 0.0
    %276 = vmatprep.subr.mxu0 0.0
    %277 = vmatpush1.xpose.msra.mxu0 0.0
    %278 = vmatprep.subr.mxu0 0.0
    %279 = vmatpush1.xpose.msra.mxu0 0.0
    %280 = vmatprep.subr.mxu0 0.0
    %281 = vmatpush1.xpose.msra.mxu0 0.0
    %282 = vmatprep.subr.mxu0 0.0
    %283 = vmatpush1.xpose.msra.mxu0 0.0
    %284 = vmatprep.mubr.f32.mxu0 0.0
    %v285 = vand.u32 %v28, 4294901760
    %v286 = vsub.f32 %v28, %v285
    %287 = vmatmul.mubr.f32.gmra.mrb[0].mxu0 %v286
    %v288 = vpop.f32.mrb[0].mxu0
    %v289 = vadd.f32 %v209, %v288
    %v290 = vpop.f32.mrb[0].mxu0
    %291 = vdwg.mxu0
    %292 = vmatprep.subr.mxu0 0.0
    %v293 = vand.u32 %v31, 4294901760
    %294 = vmatpush1.xpose.msra.mxu0 %v293
    %295 = vmatprep.subr.mxu0 0.0
    %v296 = vand.u32 %v34, 4294901760
    %297 = vmatpush1.xpose.msra.mxu0 %v296
    %298 = vmatprep.subr.mxu0 0.0
    %v299 = vand.u32 %v37, 4294901760
    %300 = vmatpush1.xpose.msra.mxu0 %v299
    %301 = vmatprep.subr.mxu0 0.0
    %v302 = vand.u32 %v40, 4294901760
    %303 = vmatpush1.xpose.msra.mxu0 %v302
    %304 = vmatprep.subr.mxu0 0.0
    %305 = vmatpush1.xpose.msra.mxu0 0.0
    %306 = vmatprep.subr.mxu0 0.0
    %307 = vmatpush1.xpose.msra.mxu0 0.0
    %308 = vmatprep.subr.mxu0 0.0
    %309 = vmatpush1.xpose.msra.mxu0 0.0
    %310 = vmatprep.subr.mxu0 0.0
    %311 = vmatpush1.xpose.msra.mxu0 0.0
    %312 = vmatprep.subr.mxu0 0.0
    %313 = vmatpush1.xpose.msra.mxu0 0.0
    %314 = vmatprep.subr.mxu0 0.0
    %315 = vmatpush1.xpose.msra.mxu0 0.0
    %316 = vmatprep.subr.mxu0 0.0
    %317 = vmatpush1.xpose.msra.mxu0 0.0
    %318 = vmatprep.subr.mxu0 0.0
    %319 = vmatpush1.xpose.msra.mxu0 0.0
    %320 = vmatprep.subr.mxu0 0.0
    %321 = vmatpush1.xpose.msra.mxu0 0.0
    %322 = vmatprep.subr.mxu0 0.0
    %323 = vmatpush1.xpose.msra.mxu0 0.0
    %324 = vmatprep.subr.mxu0 0.0
    %325 = vmatpush1.xpose.msra.mxu0 0.0
    %326 = vmatprep.subr.mxu0 0.0
    %327 = vmatpush1.xpose.msra.mxu0 0.0
    %328 = vmatprep.subr.mxu0 0.0
    %329 = vmatpush1.xpose.msra.mxu0 0.0
    %330 = vmatprep.subr.mxu0 0.0
    %331 = vmatpush1.xpose.msra.mxu0 0.0
    %332 = vmatprep.subr.mxu0 0.0
    %333 = vmatpush1.xpose.msra.mxu0 0.0
    %334 = vmatprep.subr.mxu0 0.0
    %335 = vmatpush1.xpose.msra.mxu0 0.0
    %336 = vmatprep.subr.mxu0 0.0
    %337 = vmatpush1.xpose.msra.mxu0 0.0
    %338 = vmatprep.subr.mxu0 0.0
    %339 = vmatpush1.xpose.msra.mxu0 0.0
    %340 = vmatprep.subr.mxu0 0.0
    %341 = vmatpush1.xpose.msra.mxu0 0.0
    %342 = vmatprep.subr.mxu0 0.0
    %343 = vmatpush1.xpose.msra.mxu0 0.0
    %344 = vmatprep.subr.mxu0 0.0
    %345 = vmatpush1.xpose.msra.mxu0 0.0
    %346 = vmatprep.subr.mxu0 0.0
    %347 = vmatpush1.xpose.msra.mxu0 0.0
    %348 = vmatprep.subr.mxu0 0.0
    %349 = vmatpush1.xpose.msra.mxu0 0.0
    %350 = vmatprep.subr.mxu0 0.0
    %351 = vmatpush1.xpose.msra.mxu0 0.0
    %352 = vmatprep.subr.mxu0 0.0
    %353 = vmatpush1.xpose.msra.mxu0 0.0
    %354 = vmatprep.subr.mxu0 0.0
    %355 = vmatpush1.xpose.msra.mxu0 0.0
    %356 = vmatprep.subr.mxu0 0.0
    %357 = vmatpush1.xpose.msra.mxu0 0.0
    %358 = vmatprep.subr.mxu0 0.0
    %359 = vmatpush1.xpose.msra.mxu0 0.0
    %360 = vmatprep.mubr.f32.mxu0 0.0
    %v361 = vand.u32 %v28, 4294901760
    %v362 = vsub.f32 %v28, %v361
    %v363 = vand.u32 %v362, 4294901760
    %364 = vmatmul.mubr.f32.gmra.mrb[0].mxu0 %v363
    %v365 = vpop.f32.mrb[0].mxu0
    %v366 = vadd.f32 %v289, %v365
    %v367 = vpop.f32.mrb[0].mxu0
    %368 = vdwg.mxu0
    %369 = vmatprep.subr.mxu0 0.0
    %v370 = vand.u32 %v31, 4294901760
    %v371 = vsub.f32 %v31, %v370
    %v372 = vand.u32 %v371, 4294901760
    %373 = vmatpush1.xpose.msra.mxu0 %v372
    %374 = vmatprep.subr.mxu0 0.0
    %v375 = vand.u32 %v34, 4294901760
    %v376 = vsub.f32 %v34, %v375
    %v377 = vand.u32 %v376, 4294901760
    %378 = vmatpush1.xpose.msra.mxu0 %v377
    %379 = vmatprep.subr.mxu0 0.0
    %v380 = vand.u32 %v37, 4294901760
    %v381 = vsub.f32 %v37, %v380
    %v382 = vand.u32 %v381, 4294901760
    %383 = vmatpush1.xpose.msra.mxu0 %v382
    %384 = vmatprep.subr.mxu0 0.0
    %v385 = vand.u32 %v40, 4294901760
    %v386 = vsub.f32 %v40, %v385
    %v387 = vand.u32 %v386, 4294901760
    %388 = vmatpush1.xpose.msra.mxu0 %v387
    %389 = vmatprep.subr.mxu0 0.0
    %390 = vmatpush1.xpose.msra.mxu0 0.0
    %391 = vmatprep.subr.mxu0 0.0
    %392 = vmatpush1.xpose.msra.mxu0 0.0
    %393 = vmatprep.subr.mxu0 0.0
    %394 = vmatpush1.xpose.msra.mxu0 0.0
    %395 = vmatprep.subr.mxu0 0.0
    %396 = vmatpush1.xpose.msra.mxu0 0.0
    %397 = vmatprep.subr.mxu0 0.0
    %398 = vmatpush1.xpose.msra.mxu0 0.0
    %399 = vmatprep.subr.mxu0 0.0
    %400 = vmatpush1.xpose.msra.mxu0 0.0
    %401 = vmatprep.subr.mxu0 0.0
    %402 = vmatpush1.xpose.msra.mxu0 0.0
    %403 = vmatprep.subr.mxu0 0.0
    %404 = vmatpush1.xpose.msra.mxu0 0.0
    %405 = vmatprep.subr.mxu0 0.0
    %406 = vmatpush1.xpose.msra.mxu0 0.0
    %407 = vmatprep.subr.mxu0 0.0
    %408 = vmatpush1.xpose.msra.mxu0 0.0
    %409 = vmatprep.subr.mxu0 0.0
    %410 = vmatpush1.xpose.msra.mxu0 0.0
    %411 = vmatprep.subr.mxu0 0.0
    %412 = vmatpush1.xpose.msra.mxu0 0.0
    %413 = vmatprep.subr.mxu0 0.0
    %414 = vmatpush1.xpose.msra.mxu0 0.0
    %415 = vmatprep.subr.mxu0 0.0
    %416 = vmatpush1.xpose.msra.mxu0 0.0
    %417 = vmatprep.subr.mxu0 0.0
    %418 = vmatpush1.xpose.msra.mxu0 0.0
    %419 = vmatprep.subr.mxu0 0.0
    %420 = vmatpush1.xpose.msra.mxu0 0.0
    %421 = vmatprep.subr.mxu0 0.0
    %422 = vmatpush1.xpose.msra.mxu0 0.0
    %423 = vmatprep.subr.mxu0 0.0
    %424 = vmatpush1.xpose.msra.mxu0 0.0
    %425 = vmatprep.subr.mxu0 0.0
    %426 = vmatpush1.xpose.msra.mxu0 0.0
    %427 = vmatprep.subr.mxu0 0.0
    %428 = vmatpush1.xpose.msra.mxu0 0.0
    %429 = vmatprep.subr.mxu0 0.0
    %430 = vmatpush1.xpose.msra.mxu0 0.0
    %431 = vmatprep.subr.mxu0 0.0
    %432 = vmatpush1.xpose.msra.mxu0 0.0
    %433 = vmatprep.subr.mxu0 0.0
    %434 = vmatpush1.xpose.msra.mxu0 0.0
    %435 = vmatprep.subr.mxu0 0.0
    %436 = vmatpush1.xpose.msra.mxu0 0.0
    %437 = vmatprep.subr.mxu0 0.0
    %438 = vmatpush1.xpose.msra.mxu0 0.0
    %439 = vmatprep.subr.mxu0 0.0
    %440 = vmatpush1.xpose.msra.mxu0 0.0
    %441 = vmatprep.subr.mxu0 0.0
    %442 = vmatpush1.xpose.msra.mxu0 0.0
    %443 = vmatprep.subr.mxu0 0.0
    %444 = vmatpush1.xpose.msra.mxu0 0.0
    %445 = vmatprep.mubr.f32.mxu0 0.0
    %v446 = vand.u32 %v28, 4294901760
    %447 = vmatmul.mubr.f32.gmra.mrb[0].mxu0 %v446
    %v448 = vpop.f32.mrb[0].mxu0
    %v449 = vadd.f32 %v366, %v448
    %v450 = vpop.f32.mrb[0].mxu0
    %451 = vdwg.mxu0
    %452 = vmatprep.subr.mxu0 0.0
    %v453 = vand.u32 %v31, 4294901760
    %454 = vmatpush1.xpose.msra.mxu0 %v453
    %455 = vmatprep.subr.mxu0 0.0
    %v456 = vand.u32 %v34, 4294901760
    %457 = vmatpush1.xpose.msra.mxu0 %v456
    %458 = vmatprep.subr.mxu0 0.0
    %v459 = vand.u32 %v37, 4294901760
    %460 = vmatpush1.xpose.msra.mxu0 %v459
    %461 = vmatprep.subr.mxu0 0.0
    %v462 = vand.u32 %v40, 4294901760
    %463 = vmatpush1.xpose.msra.mxu0 %v462
    %464 = vmatprep.subr.mxu0 0.0
    %465 = vmatpush1.xpose.msra.mxu0 0.0
    %466 = vmatprep.subr.mxu0 0.0
    %467 = vmatpush1.xpose.msra.mxu0 0.0
    %468 = vmatprep.subr.mxu0 0.0
    %469 = vmatpush1.xpose.msra.mxu0 0.0
    %470 = vmatprep.subr.mxu0 0.0
    %471 = vmatpush1.xpose.msra.mxu0 0.0
    %472 = vmatprep.subr.mxu0 0.0
    %473 = vmatpush1.xpose.msra.mxu0 0.0
    %474 = vmatprep.subr.mxu0 0.0
    %475 = vmatpush1.xpose.msra.mxu0 0.0
    %476 = vmatprep.subr.mxu0 0.0
    %477 = vmatpush1.xpose.msra.mxu0 0.0
    %478 = vmatprep.subr.mxu0 0.0
    %479 = vmatpush1.xpose.msra.mxu0 0.0
    %480 = vmatprep.subr.mxu0 0.0
    %481 = vmatpush1.xpose.msra.mxu0 0.0
    %482 = vmatprep.subr.mxu0 0.0
    %483 = vmatpush1.xpose.msra.mxu0 0.0
    %484 = vmatprep.subr.mxu0 0.0
    %485 = vmatpush1.xpose.msra.mxu0 0.0
    %486 = vmatprep.subr.mxu0 0.0
    %487 = vmatpush1.xpose.msra.mxu0 0.0
    %488 = vmatprep.subr.mxu0 0.0
    %489 = vmatpush1.xpose.msra.mxu0 0.0
    %490 = vmatprep.subr.mxu0 0.0
    %491 = vmatpush1.xpose.msra.mxu0 0.0
    %492 = vmatprep.subr.mxu0 0.0
    %493 = vmatpush1.xpose.msra.mxu0 0.0
    %494 = vmatprep.subr.mxu0 0.0
    %495 = vmatpush1.xpose.msra.mxu0 0.0
    %496 = vmatprep.subr.mxu0 0.0
    %497 = vmatpush1.xpose.msra.mxu0 0.0
    %498 = vmatprep.subr.mxu0 0.0
    %499 = vmatpush1.xpose.msra.mxu0 0.0
    %500 = vmatprep.subr.mxu0 0.0
    %501 = vmatpush1.xpose.msra.mxu0 0.0
    %502 = vmatprep.subr.mxu0 0.0
    %503 = vmatpush1.xpose.msra.mxu0 0.0
    %504 = vmatprep.subr.mxu0 0.0
    %505 = vmatpush1.xpose.msra.mxu0 0.0
    %506 = vmatprep.subr.mxu0 0.0
    %507 = vmatpush1.xpose.msra.mxu0 0.0
    %508 = vmatprep.subr.mxu0 0.0
    %509 = vmatpush1.xpose.msra.mxu0 0.0
    %510 = vmatprep.subr.mxu0 0.0
    %511 = vmatpush1.xpose.msra.mxu0 0.0
    %512 = vmatprep.subr.mxu0 0.0
    %513 = vmatpush1.xpose.msra.mxu0 0.0
    %514 = vmatprep.subr.mxu0 0.0
    %515 = vmatpush1.xpose.msra.mxu0 0.0
    %516 = vmatprep.subr.mxu0 0.0
    %517 = vmatpush1.xpose.msra.mxu0 0.0
    %518 = vmatprep.subr.mxu0 0.0
    %519 = vmatpush1.xpose.msra.mxu0 0.0
    %520 = vmatprep.mubr.f32.mxu0 0.0
    %v521 = vand.u32 %v28, 4294901760
    %522 = vmatmul.mubr.f32.gmra.mrb[0].mxu0 %v521
    %v523 = vpop.f32.mrb[0].mxu0
    %v524 = vadd.f32 %v449, %v523
    %v525 = vpop.f32.mrb[0].mxu0
    %526 = vdwg.mxu0
    %v527 = vld [vmem:[%s3] sm:$0xff]
    %v528 = vld [vmem:[%s4] sm:$0xff]
    %v529 = vld [vmem:[%s4 + $0x8] sm:$0xff]
    %v530 = vld [vmem:[%s4 + $0x10] sm:$0xff]
    %v531 = vld [vmem:[%s4 + $0x18] sm:$0xff]
    %v532 = vld [vmem:[%s4 + $0x20] sm:$0xff]
    %v533 = vld [vmem:[%s4 + $0x28] sm:$0xff]
    %v534 = vld [vmem:[%s4 + $0x30] sm:$0xff]
    %v535 = vld [vmem:[%s4 + $0x38] sm:$0xff]
    %v536 = vld [vmem:[%s4 + $0x40] sm:$0xff]
    %v537 = vld [vmem:[%s4 + $0x48] sm:$0xff]
    %v538 = vld [vmem:[%s4 + $0x50] sm:$0xff]
    %v539 = vld [vmem:[%s4 + $0x58] sm:$0xff]
    %v540 = vld [vmem:[%s4 + $0x60] sm:$0xff]
    %v541 = vld [vmem:[%s4 + $0x68] sm:$0xff]
    %v542 = vld [vmem:[%s4 + $0x70] sm:$0xff]
    %v543 = vld [vmem:[%s4 + $0x78] sm:$0xff]
    %v544 = vld [vmem:[%s4 + $0x80] sm:$0xff]
    %v545 = vld [vmem:[%s4 + $0x88] sm:$0xff]
    %v546 = vld [vmem:[%s4 + $0x90] sm:$0xff]
    %v547 = vld [vmem:[%s4 + $0x98] sm:$0xff]
    %v548 = vld [vmem:[%s4 + $0xa0] sm:$0xff]
    %v549 = vld [vmem:[%s4 + $0xa8] sm:$0xff]
    %v550 = vld [vmem:[%s4 + $0xb0] sm:$0xff]
    %v551 = vld [vmem:[%s4 + $0xb8] sm:$0xff]
    %v552 = vld [vmem:[%s4 + $0xc0] sm:$0xff]
    %v553 = vld [vmem:[%s4 + $0xc8] sm:$0xff]
    %v554 = vld [vmem:[%s4 + $0xd0] sm:$0xff]
    %v555 = vld [vmem:[%s4 + $0xd8] sm:$0xff]
    %v556 = vld [vmem:[%s4 + $0xe0] sm:$0xff]
    %v557 = vld [vmem:[%s4 + $0xe8] sm:$0xff]
    %v558 = vld [vmem:[%s4 + $0xf0] sm:$0xff]
    %v559 = vld [vmem:[%s4 + $0xf8] sm:$0xff]
    %v561 = vsel %vm26, %v527, 0
    %v564 = vsel %vm26, %v528, 0
    %v567 = vsel %vm26, %v529, 0
    %v570 = vsel %vm26, %v530, 0
    %v573 = vsel %vm26, %v531, 0
    %v576 = vsel %vm26, %v532, 0
    %v579 = vsel %vm26, %v533, 0
    %v582 = vsel %vm26, %v534, 0
    %v585 = vsel %vm26, %v535, 0
    %v588 = vsel %vm26, %v536, 0
    %v591 = vsel %vm26, %v537, 0
    %v594 = vsel %vm26, %v538, 0
    %v597 = vsel %vm26, %v539, 0
    %v600 = vsel %vm26, %v540, 0
    %v603 = vsel %vm26, %v541, 0
    %v606 = vsel %vm26, %v542, 0
    %v609 = vsel %vm26, %v543, 0
    %v612 = vsel %vm26, %v544, 0
    %v615 = vsel %vm26, %v545, 0
    %v618 = vsel %vm26, %v546, 0
    %v621 = vsel %vm26, %v547, 0
    %v624 = vsel %vm26, %v548, 0
    %v627 = vsel %vm26, %v549, 0
    %v630 = vsel %vm26, %v550, 0
    %v633 = vsel %vm26, %v551, 0
    %v636 = vsel %vm26, %v552, 0
    %v639 = vsel %vm26, %v553, 0
    %v642 = vsel %vm26, %v554, 0
    %v645 = vsel %vm26, %v555, 0
    %v648 = vsel %vm26, %v556, 0
    %v651 = vsel %vm26, %v557, 0
    %v654 = vsel %vm26, %v558, 0
    %v657 = vsel %vm26, %v559, 0
    %659 = vmatprep.subr.mxu0 0.0
    %v660 = vand.u32 %v564, 4294901760
    %661 = vmatpush1.xpose.msra.mxu0 %v660
    %662 = vmatprep.subr.mxu0 0.0
    %v663 = vand.u32 %v567, 4294901760
    %664 = vmatpush1.xpose.msra.mxu0 %v663
    %665 = vmatprep.subr.mxu0 0.0
    %v666 = vand.u32 %v570, 4294901760
    %667 = vmatpush1.xpose.msra.mxu0 %v666
    %668 = vmatprep.subr.mxu0 0.0
    %v669 = vand.u32 %v573, 4294901760
    %670 = vmatpush1.xpose.msra.mxu0 %v669
    %671 = vmatprep.subr.mxu0 0.0
    %v672 = vand.u32 %v576, 4294901760
    %673 = vmatpush1.xpose.msra.mxu0 %v672
    %674 = vmatprep.subr.mxu0 0.0
    %v675 = vand.u32 %v579, 4294901760
    %676 = vmatpush1.xpose.msra.mxu0 %v675
    %677 = vmatprep.subr.mxu0 0.0
    %v678 = vand.u32 %v582, 4294901760
    %679 = vmatpush1.xpose.msra.mxu0 %v678
    %680 = vmatprep.subr.mxu0 0.0
    %v681 = vand.u32 %v585, 4294901760
    %682 = vmatpush1.xpose.msra.mxu0 %v681
    %683 = vmatprep.subr.mxu0 0.0
    %v684 = vand.u32 %v588, 4294901760
    %685 = vmatpush1.xpose.msra.mxu0 %v684
    %686 = vmatprep.subr.mxu0 0.0
    %v687 = vand.u32 %v591, 4294901760
    %688 = vmatpush1.xpose.msra.mxu0 %v687
    %689 = vmatprep.subr.mxu0 0.0
    %v690 = vand.u32 %v594, 4294901760
    %691 = vmatpush1.xpose.msra.mxu0 %v690
    %692 = vmatprep.subr.mxu0 0.0
    %v693 = vand.u32 %v597, 4294901760
    %694 = vmatpush1.xpose.msra.mxu0 %v693
    %695 = vmatprep.subr.mxu0 0.0
    %v696 = vand.u32 %v600, 4294901760
    %697 = vmatpush1.xpose.msra.mxu0 %v696
    %698 = vmatprep.subr.mxu0 0.0
    %v699 = vand.u32 %v603, 4294901760
    %700 = vmatpush1.xpose.msra.mxu0 %v699
    %701 = vmatprep.subr.mxu0 0.0
    %v702 = vand.u32 %v606, 4294901760
    %703 = vmatpush1.xpose.msra.mxu0 %v702
    %704 = vmatprep.subr.mxu0 0.0
    %v705 = vand.u32 %v609, 4294901760
    %706 = vmatpush1.xpose.msra.mxu0 %v705
    %707 = vmatprep.subr.mxu0 0.0
    %v708 = vand.u32 %v612, 4294901760
    %709 = vmatpush1.xpose.msra.mxu0 %v708
    %710 = vmatprep.subr.mxu0 0.0
    %v711 = vand.u32 %v615, 4294901760
    %712 = vmatpush1.xpose.msra.mxu0 %v711
    %713 = vmatprep.subr.mxu0 0.0
    %v714 = vand.u32 %v618, 4294901760
    %715 = vmatpush1.xpose.msra.mxu0 %v714
    %716 = vmatprep.subr.mxu0 0.0
    %v717 = vand.u32 %v621, 4294901760
    %718 = vmatpush1.xpose.msra.mxu0 %v717
    %719 = vmatprep.subr.mxu0 0.0
    %v720 = vand.u32 %v624, 4294901760
    %721 = vmatpush1.xpose.msra.mxu0 %v720
    %722 = vmatprep.subr.mxu0 0.0
    %v723 = vand.u32 %v627, 4294901760
    %724 = vmatpush1.xpose.msra.mxu0 %v723
    %725 = vmatprep.subr.mxu0 0.0
    %v726 = vand.u32 %v630, 4294901760
    %727 = vmatpush1.xpose.msra.mxu0 %v726
    %728 = vmatprep.subr.mxu0 0.0
    %v729 = vand.u32 %v633, 4294901760
    %730 = vmatpush1.xpose.msra.mxu0 %v729
    %731 = vmatprep.subr.mxu0 0.0
    %v732 = vand.u32 %v636, 4294901760
    %733 = vmatpush1.xpose.msra.mxu0 %v732
    %734 = vmatprep.subr.mxu0 0.0
    %v735 = vand.u32 %v639, 4294901760
    %736 = vmatpush1.xpose.msra.mxu0 %v735
    %737 = vmatprep.subr.mxu0 0.0
    %v738 = vand.u32 %v642, 4294901760
    %739 = vmatpush1.xpose.msra.mxu0 %v738
    %740 = vmatprep.subr.mxu0 0.0
    %v741 = vand.u32 %v645, 4294901760
    %742 = vmatpush1.xpose.msra.mxu0 %v741
    %743 = vmatprep.subr.mxu0 0.0
    %v744 = vand.u32 %v648, 4294901760
    %745 = vmatpush1.xpose.msra.mxu0 %v744
    %746 = vmatprep.subr.mxu0 0.0
    %v747 = vand.u32 %v651, 4294901760
    %748 = vmatpush1.xpose.msra.mxu0 %v747
    %749 = vmatprep.subr.mxu0 0.0
    %v750 = vand.u32 %v654, 4294901760
    %751 = vmatpush1.xpose.msra.mxu0 %v750
    %752 = vmatprep.subr.mxu0 0.0
    %v753 = vand.u32 %v657, 4294901760
    %754 = vmatpush1.xpose.msra.mxu0 %v753
    %755 = vmatprep.mubr.f32.mxu0 0.0
    %v756 = vand.u32 %v561, 4294901760
    %v757 = vsub.f32 %v561, %v756
    %v758 = vand.u32 %v757, 4294901760
    %v759 = vsub.f32 %v757, %v758
    %v760 = vand.u32 %v759, 4294901760
    %761 = vmatmul.mubr.f32.gmra.mrb[0].mxu0 %v760
    %v762 = vpop.f32.mrb[0].mxu0
    %v763 = vadd.f32 0.0, %v762
    %v764 = vpop.f32.mrb[0].mxu0
    %v765 = vadd.f32 0.0, %v764
    %766 = vdwg.mxu0
    %767 = vmatprep.subr.mxu0 0.0
    %v768 = vand.u32 %v564, 4294901760
    %v769 = vsub.f32 %v564, %v768
    %v770 = vand.u32 %v769, 4294901760
    %v771 = vsub.f32 %v769, %v770
    %v772 = vand.u32 %v771, 4294901760
    %773 = vmatpush1.xpose.msra.mxu0 %v772
    %774 = vmatprep.subr.mxu0 0.0
    %v775 = vand.u32 %v567, 4294901760
    %v776 = vsub.f32 %v567, %v775
    %v777 = vand.u32 %v776, 4294901760
    %v778 = vsub.f32 %v776, %v777
    %v779 = vand.u32 %v778, 4294901760
    %780 = vmatpush1.xpose.msra.mxu0 %v779
    %781 = vmatprep.subr.mxu0 0.0
    %v782 = vand.u32 %v570, 4294901760
    %v783 = vsub.f32 %v570, %v782
    %v784 = vand.u32 %v783, 4294901760
    %v785 = vsub.f32 %v783, %v784
    %v786 = vand.u32 %v785, 4294901760
    %787 = vmatpush1.xpose.msra.mxu0 %v786
    %788 = vmatprep.subr.mxu0 0.0
    %v789 = vand.u32 %v573, 4294901760
    %v790 = vsub.f32 %v573, %v789
    %v791 = vand.u32 %v790, 4294901760
    %v792 = vsub.f32 %v790, %v791
    %v793 = vand.u32 %v792, 4294901760
    %794 = vmatpush1.xpose.msra.mxu0 %v793
    %795 = vmatprep.subr.mxu0 0.0
    %v796 = vand.u32 %v576, 4294901760
    %v797 = vsub.f32 %v576, %v796
    %v798 = vand.u32 %v797, 4294901760
    %v799 = vsub.f32 %v797, %v798
    %v800 = vand.u32 %v799, 4294901760
    %801 = vmatpush1.xpose.msra.mxu0 %v800
    %802 = vmatprep.subr.mxu0 0.0
    %v803 = vand.u32 %v579, 4294901760
    %v804 = vsub.f32 %v579, %v803
    %v805 = vand.u32 %v804, 4294901760
    %v806 = vsub.f32 %v804, %v805
    %v807 = vand.u32 %v806, 4294901760
    %808 = vmatpush1.xpose.msra.mxu0 %v807
    %809 = vmatprep.subr.mxu0 0.0
    %v810 = vand.u32 %v582, 4294901760
    %v811 = vsub.f32 %v582, %v810
    %v812 = vand.u32 %v811, 4294901760
    %v813 = vsub.f32 %v811, %v812
    %v814 = vand.u32 %v813, 4294901760
    %815 = vmatpush1.xpose.msra.mxu0 %v814
    %816 = vmatprep.subr.mxu0 0.0
    %v817 = vand.u32 %v585, 4294901760
    %v818 = vsub.f32 %v585, %v817
    %v819 = vand.u32 %v818, 4294901760
    %v820 = vsub.f32 %v818, %v819
    %v821 = vand.u32 %v820, 4294901760
    %822 = vmatpush1.xpose.msra.mxu0 %v821
    %823 = vmatprep.subr.mxu0 0.0
    %v824 = vand.u32 %v588, 4294901760
    %v825 = vsub.f32 %v588, %v824
    %v826 = vand.u32 %v825, 4294901760
    %v827 = vsub.f32 %v825, %v826
    %v828 = vand.u32 %v827, 4294901760
    %829 = vmatpush1.xpose.msra.mxu0 %v828
    %830 = vmatprep.subr.mxu0 0.0
    %v831 = vand.u32 %v591, 4294901760
    %v832 = vsub.f32 %v591, %v831
    %v833 = vand.u32 %v832, 4294901760
    %v834 = vsub.f32 %v832, %v833
    %v835 = vand.u32 %v834, 4294901760
    %836 = vmatpush1.xpose.msra.mxu0 %v835
    %837 = vmatprep.subr.mxu0 0.0
    %v838 = vand.u32 %v594, 4294901760
    %v839 = vsub.f32 %v594, %v838
    %v840 = vand.u32 %v839, 4294901760
    %v841 = vsub.f32 %v839, %v840
    %v842 = vand.u32 %v841, 4294901760
    %843 = vmatpush1.xpose.msra.mxu0 %v842
    %844 = vmatprep.subr.mxu0 0.0
    %v845 = vand.u32 %v597, 4294901760
    %v846 = vsub.f32 %v597, %v845
    %v847 = vand.u32 %v846, 4294901760
    %v848 = vsub.f32 %v846, %v847
    %v849 = vand.u32 %v848, 4294901760
    %850 = vmatpush1.xpose.msra.mxu0 %v849
    %851 = vmatprep.subr.mxu0 0.0
    %v852 = vand.u32 %v600, 4294901760
    %v853 = vsub.f32 %v600, %v852
    %v854 = vand.u32 %v853, 4294901760
    %v855 = vsub.f32 %v853, %v854
    %v856 = vand.u32 %v855, 4294901760
    %857 = vmatpush1.xpose.msra.mxu0 %v856
    %858 = vmatprep.subr.mxu0 0.0
    %v859 = vand.u32 %v603, 4294901760
    %v860 = vsub.f32 %v603, %v859
    %v861 = vand.u32 %v860, 4294901760
    %v862 = vsub.f32 %v860, %v861
    %v863 = vand.u32 %v862, 4294901760
    %864 = vmatpush1.xpose.msra.mxu0 %v863
    %865 = vmatprep.subr.mxu0 0.0
    %v866 = vand.u32 %v606, 4294901760
    %v867 = vsub.f32 %v606, %v866
    %v868 = vand.u32 %v867, 4294901760
    %v869 = vsub.f32 %v867, %v868
    %v870 = vand.u32 %v869, 4294901760
    %871 = vmatpush1.xpose.msra.mxu0 %v870
    %872 = vmatprep.subr.mxu0 0.0
    %v873 = vand.u32 %v609, 4294901760
    %v874 = vsub.f32 %v609, %v873
    %v875 = vand.u32 %v874, 4294901760
    %v876 = vsub.f32 %v874, %v875
    %v877 = vand.u32 %v876, 4294901760
    %878 = vmatpush1.xpose.msra.mxu0 %v877
    %879 = vmatprep.subr.mxu0 0.0
    %v880 = vand.u32 %v612, 4294901760
    %v881 = vsub.f32 %v612, %v880
    %v882 = vand.u32 %v881, 4294901760
    %v883 = vsub.f32 %v881, %v882
    %v884 = vand.u32 %v883, 4294901760
    %885 = vmatpush1.xpose.msra.mxu0 %v884
    %886 = vmatprep.subr.mxu0 0.0
    %v887 = vand.u32 %v615, 4294901760
    %v888 = vsub.f32 %v615, %v887
    %v889 = vand.u32 %v888, 4294901760
    %v890 = vsub.f32 %v888, %v889
    %v891 = vand.u32 %v890, 4294901760
    %892 = vmatpush1.xpose.msra.mxu0 %v891
    %893 = vmatprep.subr.mxu0 0.0
    %v894 = vand.u32 %v618, 4294901760
    %v895 = vsub.f32 %v618, %v894
    %v896 = vand.u32 %v895, 4294901760
    %v897 = vsub.f32 %v895, %v896
    %v898 = vand.u32 %v897, 4294901760
    %899 = vmatpush1.xpose.msra.mxu0 %v898
    %900 = vmatprep.subr.mxu0 0.0
    %v901 = vand.u32 %v621, 4294901760
    %v902 = vsub.f32 %v621, %v901
    %v903 = vand.u32 %v902, 4294901760
    %v904 = vsub.f32 %v902, %v903
    %v905 = vand.u32 %v904, 4294901760
    %906 = vmatpush1.xpose.msra.mxu0 %v905
    %907 = vmatprep.subr.mxu0 0.0
    %v908 = vand.u32 %v624, 4294901760
    %v909 = vsub.f32 %v624, %v908
    %v910 = vand.u32 %v909, 4294901760
    %v911 = vsub.f32 %v909, %v910
    %v912 = vand.u32 %v911, 4294901760
    %913 = vmatpush1.xpose.msra.mxu0 %v912
    %914 = vmatprep.subr.mxu0 0.0
    %v915 = vand.u32 %v627, 4294901760
    %v916 = vsub.f32 %v627, %v915
    %v917 = vand.u32 %v916, 4294901760
    %v918 = vsub.f32 %v916, %v917
    %v919 = vand.u32 %v918, 4294901760
    %920 = vmatpush1.xpose.msra.mxu0 %v919
    %921 = vmatprep.subr.mxu0 0.0
    %v922 = vand.u32 %v630, 4294901760
    %v923 = vsub.f32 %v630, %v922
    %v924 = vand.u32 %v923, 4294901760
    %v925 = vsub.f32 %v923, %v924
    %v926 = vand.u32 %v925, 4294901760
    %927 = vmatpush1.xpose.msra.mxu0 %v926
    %928 = vmatprep.subr.mxu0 0.0
    %v929 = vand.u32 %v633, 4294901760
    %v930 = vsub.f32 %v633, %v929
    %v931 = vand.u32 %v930, 4294901760
    %v932 = vsub.f32 %v930, %v931
    %v933 = vand.u32 %v932, 4294901760
    %934 = vmatpush1.xpose.msra.mxu0 %v933
    %935 = vmatprep.subr.mxu0 0.0
    %v936 = vand.u32 %v636, 4294901760
    %v937 = vsub.f32 %v636, %v936
    %v938 = vand.u32 %v937, 4294901760
    %v939 = vsub.f32 %v937, %v938
    %v940 = vand.u32 %v939, 4294901760
    %941 = vmatpush1.xpose.msra.mxu0 %v940
    %942 = vmatprep.subr.mxu0 0.0
    %v943 = vand.u32 %v639, 4294901760
    %v944 = vsub.f32 %v639, %v943
    %v945 = vand.u32 %v944, 4294901760
    %v946 = vsub.f32 %v944, %v945
    %v947 = vand.u32 %v946, 4294901760
    %948 = vmatpush1.xpose.msra.mxu0 %v947
    %949 = vmatprep.subr.mxu0 0.0
    %v950 = vand.u32 %v642, 4294901760
    %v951 = vsub.f32 %v642, %v950
    %v952 = vand.u32 %v951, 4294901760
    %v953 = vsub.f32 %v951, %v952
    %v954 = vand.u32 %v953, 4294901760
    %955 = vmatpush1.xpose.msra.mxu0 %v954
    %956 = vmatprep.subr.mxu0 0.0
    %v957 = vand.u32 %v645, 4294901760
    %v958 = vsub.f32 %v645, %v957
    %v959 = vand.u32 %v958, 4294901760
    %v960 = vsub.f32 %v958, %v959
    %v961 = vand.u32 %v960, 4294901760
    %962 = vmatpush1.xpose.msra.mxu0 %v961
    %963 = vmatprep.subr.mxu0 0.0
    %v964 = vand.u32 %v648, 4294901760
    %v965 = vsub.f32 %v648, %v964
    %v966 = vand.u32 %v965, 4294901760
    %v967 = vsub.f32 %v965, %v966
    %v968 = vand.u32 %v967, 4294901760
    %969 = vmatpush1.xpose.msra.mxu0 %v968
    %970 = vmatprep.subr.mxu0 0.0
    %v971 = vand.u32 %v651, 4294901760
    %v972 = vsub.f32 %v651, %v971
    %v973 = vand.u32 %v972, 4294901760
    %v974 = vsub.f32 %v972, %v973
    %v975 = vand.u32 %v974, 4294901760
    %976 = vmatpush1.xpose.msra.mxu0 %v975
    %977 = vmatprep.subr.mxu0 0.0
    %v978 = vand.u32 %v654, 4294901760
    %v979 = vsub.f32 %v654, %v978
    %v980 = vand.u32 %v979, 4294901760
    %v981 = vsub.f32 %v979, %v980
    %v982 = vand.u32 %v981, 4294901760
    %983 = vmatpush1.xpose.msra.mxu0 %v982
    %984 = vmatprep.subr.mxu0 0.0
    %v985 = vand.u32 %v657, 4294901760
    %v986 = vsub.f32 %v657, %v985
    %v987 = vand.u32 %v986, 4294901760
    %v988 = vsub.f32 %v986, %v987
    %v989 = vand.u32 %v988, 4294901760
    %990 = vmatpush1.xpose.msra.mxu0 %v989
    %991 = vmatprep.mubr.f32.mxu0 0.0
    %v992 = vand.u32 %v561, 4294901760
    %993 = vmatmul.mubr.f32.gmra.mrb[0].mxu0 %v992
    %v994 = vpop.f32.mrb[0].mxu0
    %v995 = vadd.f32 %v763, %v994
    %v996 = vpop.f32.mrb[0].mxu0
    %v997 = vadd.f32 %v765, %v996
    %998 = vdwg.mxu0
    %999 = vmatprep.subr.mxu0 0.0
    %v1000 = vand.u32 %v564, 4294901760
    %v1001 = vsub.f32 %v564, %v1000
    %1002 = vmatpush1.xpose.msra.mxu0 %v1001
    %1003 = vmatprep.subr.mxu0 0.0
    %v1004 = vand.u32 %v567, 4294901760
    %v1005 = vsub.f32 %v567, %v1004
    %1006 = vmatpush1.xpose.msra.mxu0 %v1005
    %1007 = vmatprep.subr.mxu0 0.0
    %v1008 = vand.u32 %v570, 4294901760
    %v1009 = vsub.f32 %v570, %v1008
    %1010 = vmatpush1.xpose.msra.mxu0 %v1009
    %1011 = vmatprep.subr.mxu0 0.0
    %v1012 = vand.u32 %v573, 4294901760
    %v1013 = vsub.f32 %v573, %v1012
    %1014 = vmatpush1.xpose.msra.mxu0 %v1013
    %1015 = vmatprep.subr.mxu0 0.0
    %v1016 = vand.u32 %v576, 4294901760
    %v1017 = vsub.f32 %v576, %v1016
    %1018 = vmatpush1.xpose.msra.mxu0 %v1017
    %1019 = vmatprep.subr.mxu0 0.0
    %v1020 = vand.u32 %v579, 4294901760
    %v1021 = vsub.f32 %v579, %v1020
    %1022 = vmatpush1.xpose.msra.mxu0 %v1021
    %1023 = vmatprep.subr.mxu0 0.0
    %v1024 = vand.u32 %v582, 4294901760
    %v1025 = vsub.f32 %v582, %v1024
    %1026 = vmatpush1.xpose.msra.mxu0 %v1025
    %1027 = vmatprep.subr.mxu0 0.0
    %v1028 = vand.u32 %v585, 4294901760
    %v1029 = vsub.f32 %v585, %v1028
    %1030 = vmatpush1.xpose.msra.mxu0 %v1029
    %1031 = vmatprep.subr.mxu0 0.0
    %v1032 = vand.u32 %v588, 4294901760
    %v1033 = vsub.f32 %v588, %v1032
    %1034 = vmatpush1.xpose.msra.mxu0 %v1033
    %1035 = vmatprep.subr.mxu0 0.0
    %v1036 = vand.u32 %v591, 4294901760
    %v1037 = vsub.f32 %v591, %v1036
    %1038 = vmatpush1.xpose.msra.mxu0 %v1037
    %1039 = vmatprep.subr.mxu0 0.0
    %v1040 = vand.u32 %v594, 4294901760
    %v1041 = vsub.f32 %v594, %v1040
    %1042 = vmatpush1.xpose.msra.mxu0 %v1041
    %1043 = vmatprep.subr.mxu0 0.0
    %v1044 = vand.u32 %v597, 4294901760
    %v1045 = vsub.f32 %v597, %v1044
    %1046 = vmatpush1.xpose.msra.mxu0 %v1045
    %1047 = vmatprep.subr.mxu0 0.0
    %v1048 = vand.u32 %v600, 4294901760
    %v1049 = vsub.f32 %v600, %v1048
    %1050 = vmatpush1.xpose.msra.mxu0 %v1049
    %1051 = vmatprep.subr.mxu0 0.0
    %v1052 = vand.u32 %v603, 4294901760
    %v1053 = vsub.f32 %v603, %v1052
    %1054 = vmatpush1.xpose.msra.mxu0 %v1053
    %1055 = vmatprep.subr.mxu0 0.0
    %v1056 = vand.u32 %v606, 4294901760
    %v1057 = vsub.f32 %v606, %v1056
    %1058 = vmatpush1.xpose.msra.mxu0 %v1057
    %1059 = vmatprep.subr.mxu0 0.0
    %v1060 = vand.u32 %v609, 4294901760
    %v1061 = vsub.f32 %v609, %v1060
    %1062 = vmatpush1.xpose.msra.mxu0 %v1061
    %1063 = vmatprep.subr.mxu0 0.0
    %v1064 = vand.u32 %v612, 4294901760
    %v1065 = vsub.f32 %v612, %v1064
    %1066 = vmatpush1.xpose.msra.mxu0 %v1065
    %1067 = vmatprep.subr.mxu0 0.0
    %v1068 = vand.u32 %v615, 4294901760
    %v1069 = vsub.f32 %v615, %v1068
    %1070 = vmatpush1.xpose.msra.mxu0 %v1069
    %1071 = vmatprep.subr.mxu0 0.0
    %v1072 = vand.u32 %v618, 4294901760
    %v1073 = vsub.f32 %v618, %v1072
    %1074 = vmatpush1.xpose.msra.mxu0 %v1073
    %1075 = vmatprep.subr.mxu0 0.0
    %v1076 = vand.u32 %v621, 4294901760
    %v1077 = vsub.f32 %v621, %v1076
    %1078 = vmatpush1.xpose.msra.mxu0 %v1077
    %1079 = vmatprep.subr.mxu0 0.0
    %v1080 = vand.u32 %v624, 4294901760
    %v1081 = vsub.f32 %v624, %v1080
    %1082 = vmatpush1.xpose.msra.mxu0 %v1081
    %1083 = vmatprep.subr.mxu0 0.0
    %v1084 = vand.u32 %v627, 4294901760
    %v1085 = vsub.f32 %v627, %v1084
    %1086 = vmatpush1.xpose.msra.mxu0 %v1085
    %1087 = vmatprep.subr.mxu0 0.0
    %v1088 = vand.u32 %v630, 4294901760
    %v1089 = vsub.f32 %v630, %v1088
    %1090 = vmatpush1.xpose.msra.mxu0 %v1089
    %1091 = vmatprep.subr.mxu0 0.0
    %v1092 = vand.u32 %v633, 4294901760
    %v1093 = vsub.f32 %v633, %v1092
    %1094 = vmatpush1.xpose.msra.mxu0 %v1093
    %1095 = vmatprep.subr.mxu0 0.0
    %v1096 = vand.u32 %v636, 4294901760
    %v1097 = vsub.f32 %v636, %v1096
    %1098 = vmatpush1.xpose.msra.mxu0 %v1097
    %1099 = vmatprep.subr.mxu0 0.0
    %v1100 = vand.u32 %v639, 4294901760
    %v1101 = vsub.f32 %v639, %v1100
    %1102 = vmatpush1.xpose.msra.mxu0 %v1101
    %1103 = vmatprep.subr.mxu0 0.0
    %v1104 = vand.u32 %v642, 4294901760
    %v1105 = vsub.f32 %v642, %v1104
    %1106 = vmatpush1.xpose.msra.mxu0 %v1105
    %1107 = vmatprep.subr.mxu0 0.0
    %v1108 = vand.u32 %v645, 4294901760
    %v1109 = vsub.f32 %v645, %v1108
    %1110 = vmatpush1.xpose.msra.mxu0 %v1109
    %1111 = vmatprep.subr.mxu0 0.0
    %v1112 = vand.u32 %v648, 4294901760
    %v1113 = vsub.f32 %v648, %v1112
    %1114 = vmatpush1.xpose.msra.mxu0 %v1113
    %1115 = vmatprep.subr.mxu0 0.0
    %v1116 = vand.u32 %v651, 4294901760
    %v1117 = vsub.f32 %v651, %v1116
    %1118 = vmatpush1.xpose.msra.mxu0 %v1117
    %1119 = vmatprep.subr.mxu0 0.0
    %v1120 = vand.u32 %v654, 4294901760
    %v1121 = vsub.f32 %v654, %v1120
    %1122 = vmatpush1.xpose.msra.mxu0 %v1121
    %1123 = vmatprep.subr.mxu0 0.0
    %v1124 = vand.u32 %v657, 4294901760
    %v1125 = vsub.f32 %v657, %v1124
    %1126 = vmatpush1.xpose.msra.mxu0 %v1125
    %1127 = vmatprep.mubr.f32.mxu0 0.0
    %v1128 = vand.u32 %v561, 4294901760
    %v1129 = vsub.f32 %v561, %v1128
    %1130 = vmatmul.mubr.f32.gmra.mrb[0].mxu0 %v1129
    %v1131 = vpop.f32.mrb[0].mxu0
    %v1132 = vadd.f32 %v995, %v1131
    %v1133 = vpop.f32.mrb[0].mxu0
    %v1134 = vadd.f32 %v997, %v1133
    %1135 = vdwg.mxu0
    %1136 = vmatprep.subr.mxu0 0.0
    %v1137 = vand.u32 %v564, 4294901760
    %1138 = vmatpush1.xpose.msra.mxu0 %v1137
    %1139 = vmatprep.subr.mxu0 0.0
    %v1140 = vand.u32 %v567, 4294901760
    %1141 = vmatpush1.xpose.msra.mxu0 %v1140
    %1142 = vmatprep.subr.mxu0 0.0
    %v1143 = vand.u32 %v570, 4294901760
    %1144 = vmatpush1.xpose.msra.mxu0 %v1143
    %1145 = vmatprep.subr.mxu0 0.0
    %v1146 = vand.u32 %v573, 4294901760
    %1147 = vmatpush1.xpose.msra.mxu0 %v1146
    %1148 = vmatprep.subr.mxu0 0.0
    %v1149 = vand.u32 %v576, 4294901760
    %1150 = vmatpush1.xpose.msra.mxu0 %v1149
    %1151 = vmatprep.subr.mxu0 0.0
    %v1152 = vand.u32 %v579, 4294901760
    %1153 = vmatpush1.xpose.msra.mxu0 %v1152
    %1154 = vmatprep.subr.mxu0 0.0
    %v1155 = vand.u32 %v582, 4294901760
    %1156 = vmatpush1.xpose.msra.mxu0 %v1155
    %1157 = vmatprep.subr.mxu0 0.0
    %v1158 = vand.u32 %v585, 4294901760
    %1159 = vmatpush1.xpose.msra.mxu0 %v1158
    %1160 = vmatprep.subr.mxu0 0.0
    %v1161 = vand.u32 %v588, 4294901760
    %1162 = vmatpush1.xpose.msra.mxu0 %v1161
    %1163 = vmatprep.subr.mxu0 0.0
    %v1164 = vand.u32 %v591, 4294901760
    %1165 = vmatpush1.xpose.msra.mxu0 %v1164
    %1166 = vmatprep.subr.mxu0 0.0
    %v1167 = vand.u32 %v594, 4294901760
    %1168 = vmatpush1.xpose.msra.mxu0 %v1167
    %1169 = vmatprep.subr.mxu0 0.0
    %v1170 = vand.u32 %v597, 4294901760
    %1171 = vmatpush1.xpose.msra.mxu0 %v1170
    %1172 = vmatprep.subr.mxu0 0.0
    %v1173 = vand.u32 %v600, 4294901760
    %1174 = vmatpush1.xpose.msra.mxu0 %v1173
    %1175 = vmatprep.subr.mxu0 0.0
    %v1176 = vand.u32 %v603, 4294901760
    %1177 = vmatpush1.xpose.msra.mxu0 %v1176
    %1178 = vmatprep.subr.mxu0 0.0
    %v1179 = vand.u32 %v606, 4294901760
    %1180 = vmatpush1.xpose.msra.mxu0 %v1179
    %1181 = vmatprep.subr.mxu0 0.0
    %v1182 = vand.u32 %v609, 4294901760
    %1183 = vmatpush1.xpose.msra.mxu0 %v1182
    %1184 = vmatprep.subr.mxu0 0.0
    %v1185 = vand.u32 %v612, 4294901760
    %1186 = vmatpush1.xpose.msra.mxu0 %v1185
    %1187 = vmatprep.subr.mxu0 0.0
    %v1188 = vand.u32 %v615, 4294901760
    %1189 = vmatpush1.xpose.msra.mxu0 %v1188
    %1190 = vmatprep.subr.mxu0 0.0
    %v1191 = vand.u32 %v618, 4294901760
    %1192 = vmatpush1.xpose.msra.mxu0 %v1191
    %1193 = vmatprep.subr.mxu0 0.0
    %v1194 = vand.u32 %v621, 4294901760
    %1195 = vmatpush1.xpose.msra.mxu0 %v1194
    %1196 = vmatprep.subr.mxu0 0.0
    %v1197 = vand.u32 %v624, 4294901760
    %1198 = vmatpush1.xpose.msra.mxu0 %v1197
    %1199 = vmatprep.subr.mxu0 0.0
    %v1200 = vand.u32 %v627, 4294901760
    %1201 = vmatpush1.xpose.msra.mxu0 %v1200
    %1202 = vmatprep.subr.mxu0 0.0
    %v1203 = vand.u32 %v630, 4294901760
    %1204 = vmatpush1.xpose.msra.mxu0 %v1203
    %1205 = vmatprep.subr.mxu0 0.0
    %v1206 = vand.u32 %v633, 4294901760
    %1207 = vmatpush1.xpose.msra.mxu0 %v1206
    %1208 = vmatprep.subr.mxu0 0.0
    %v1209 = vand.u32 %v636, 4294901760
    %1210 = vmatpush1.xpose.msra.mxu0 %v1209
    %1211 = vmatprep.subr.mxu0 0.0
    %v1212 = vand.u32 %v639, 4294901760
    %1213 = vmatpush1.xpose.msra.mxu0 %v1212
    %1214 = vmatprep.subr.mxu0 0.0
    %v1215 = vand.u32 %v642, 4294901760
    %1216 = vmatpush1.xpose.msra.mxu0 %v1215
    %1217 = vmatprep.subr.mxu0 0.0
    %v1218 = vand.u32 %v645, 4294901760
    %1219 = vmatpush1.xpose.msra.mxu0 %v1218
    %1220 = vmatprep.subr.mxu0 0.0
    %v1221 = vand.u32 %v648, 4294901760
    %1222 = vmatpush1.xpose.msra.mxu0 %v1221
    %1223 = vmatprep.subr.mxu0 0.0
    %v1224 = vand.u32 %v651, 4294901760
    %1225 = vmatpush1.xpose.msra.mxu0 %v1224
    %1226 = vmatprep.subr.mxu0 0.0
    %v1227 = vand.u32 %v654, 4294901760
    %1228 = vmatpush1.xpose.msra.mxu0 %v1227
    %1229 = vmatprep.subr.mxu0 0.0
    %v1230 = vand.u32 %v657, 4294901760
    %1231 = vmatpush1.xpose.msra.mxu0 %v1230
    %1232 = vmatprep.mubr.f32.mxu0 0.0
    %v1233 = vand.u32 %v561, 4294901760
    %v1234 = vsub.f32 %v561, %v1233
    %v1235 = vand.u32 %v1234, 4294901760
    %1236 = vmatmul.mubr.f32.gmra.mrb[0].mxu0 %v1235
    %v1237 = vpop.f32.mrb[0].mxu0
    %v1238 = vadd.f32 %v1132, %v1237
    %v1239 = vpop.f32.mrb[0].mxu0
    %v1240 = vadd.f32 %v1134, %v1239
    %1241 = vdwg.mxu0
    %1242 = vmatprep.subr.mxu0 0.0
    %v1243 = vand.u32 %v564, 4294901760
    %v1244 = vsub.f32 %v564, %v1243
    %v1245 = vand.u32 %v1244, 4294901760
    %1246 = vmatpush1.xpose.msra.mxu0 %v1245
    %1247 = vmatprep.subr.mxu0 0.0
    %v1248 = vand.u32 %v567, 4294901760
    %v1249 = vsub.f32 %v567, %v1248
    %v1250 = vand.u32 %v1249, 4294901760
    %1251 = vmatpush1.xpose.msra.mxu0 %v1250
    %1252 = vmatprep.subr.mxu0 0.0
    %v1253 = vand.u32 %v570, 4294901760
    %v1254 = vsub.f32 %v570, %v1253
    %v1255 = vand.u32 %v1254, 4294901760
    %1256 = vmatpush1.xpose.msra.mxu0 %v1255
    %1257 = vmatprep.subr.mxu0 0.0
    %v1258 = vand.u32 %v573, 4294901760
    %v1259 = vsub.f32 %v573, %v1258
    %v1260 = vand.u32 %v1259, 4294901760
    %1261 = vmatpush1.xpose.msra.mxu0 %v1260
    %1262 = vmatprep.subr.mxu0 0.0
    %v1263 = vand.u32 %v576, 4294901760
    %v1264 = vsub.f32 %v576, %v1263
    %v1265 = vand.u32 %v1264, 4294901760
    %1266 = vmatpush1.xpose.msra.mxu0 %v1265
    %1267 = vmatprep.subr.mxu0 0.0
    %v1268 = vand.u32 %v579, 4294901760
    %v1269 = vsub.f32 %v579, %v1268
    %v1270 = vand.u32 %v1269, 4294901760
    %1271 = vmatpush1.xpose.msra.mxu0 %v1270
    %1272 = vmatprep.subr.mxu0 0.0
    %v1273 = vand.u32 %v582, 4294901760
    %v1274 = vsub.f32 %v582, %v1273
    %v1275 = vand.u32 %v1274, 4294901760
    %1276 = vmatpush1.xpose.msra.mxu0 %v1275
    %1277 = vmatprep.subr.mxu0 0.0
    %v1278 = vand.u32 %v585, 4294901760
    %v1279 = vsub.f32 %v585, %v1278
    %v1280 = vand.u32 %v1279, 4294901760
    %1281 = vmatpush1.xpose.msra.mxu0 %v1280
    %1282 = vmatprep.subr.mxu0 0.0
    %v1283 = vand.u32 %v588, 4294901760
    %v1284 = vsub.f32 %v588, %v1283
    %v1285 = vand.u32 %v1284, 4294901760
    %1286 = vmatpush1.xpose.msra.mxu0 %v1285
    %1287 = vmatprep.subr.mxu0 0.0
    %v1288 = vand.u32 %v591, 4294901760
    %v1289 = vsub.f32 %v591, %v1288
    %v1290 = vand.u32 %v1289, 4294901760
    %1291 = vmatpush1.xpose.msra.mxu0 %v1290
    %1292 = vmatprep.subr.mxu0 0.0
    %v1293 = vand.u32 %v594, 4294901760
    %v1294 = vsub.f32 %v594, %v1293
    %v1295 = vand.u32 %v1294, 4294901760
    %1296 = vmatpush1.xpose.msra.mxu0 %v1295
    %1297 = vmatprep.subr.mxu0 0.0
    %v1298 = vand.u32 %v597, 4294901760
    %v1299 = vsub.f32 %v597, %v1298
    %v1300 = vand.u32 %v1299, 4294901760
    %1301 = vmatpush1.xpose.msra.mxu0 %v1300
    %1302 = vmatprep.subr.mxu0 0.0
    %v1303 = vand.u32 %v600, 4294901760
    %v1304 = vsub.f32 %v600, %v1303
    %v1305 = vand.u32 %v1304, 4294901760
    %1306 = vmatpush1.xpose.msra.mxu0 %v1305
    %1307 = vmatprep.subr.mxu0 0.0
    %v1308 = vand.u32 %v603, 4294901760
    %v1309 = vsub.f32 %v603, %v1308
    %v1310 = vand.u32 %v1309, 4294901760
    %1311 = vmatpush1.xpose.msra.mxu0 %v1310
    %1312 = vmatprep.subr.mxu0 0.0
    %v1313 = vand.u32 %v606, 4294901760
    %v1314 = vsub.f32 %v606, %v1313
    %v1315 = vand.u32 %v1314, 4294901760
    %1316 = vmatpush1.xpose.msra.mxu0 %v1315
    %1317 = vmatprep.subr.mxu0 0.0
    %v1318 = vand.u32 %v609, 4294901760
    %v1319 = vsub.f32 %v609, %v1318
    %v1320 = vand.u32 %v1319, 4294901760
    %1321 = vmatpush1.xpose.msra.mxu0 %v1320
    %1322 = vmatprep.subr.mxu0 0.0
    %v1323 = vand.u32 %v612, 4294901760
    %v1324 = vsub.f32 %v612, %v1323
    %v1325 = vand.u32 %v1324, 4294901760
    %1326 = vmatpush1.xpose.msra.mxu0 %v1325
    %1327 = vmatprep.subr.mxu0 0.0
    %v1328 = vand.u32 %v615, 4294901760
    %v1329 = vsub.f32 %v615, %v1328
    %v1330 = vand.u32 %v1329, 4294901760
    %1331 = vmatpush1.xpose.msra.mxu0 %v1330
    %1332 = vmatprep.subr.mxu0 0.0
    %v1333 = vand.u32 %v618, 4294901760
    %v1334 = vsub.f32 %v618, %v1333
    %v1335 = vand.u32 %v1334, 4294901760
    %1336 = vmatpush1.xpose.msra.mxu0 %v1335
    %1337 = vmatprep.subr.mxu0 0.0
    %v1338 = vand.u32 %v621, 4294901760
    %v1339 = vsub.f32 %v621, %v1338
    %v1340 = vand.u32 %v1339, 4294901760
    %1341 = vmatpush1.xpose.msra.mxu0 %v1340
    %1342 = vmatprep.subr.mxu0 0.0
    %v1343 = vand.u32 %v624, 4294901760
    %v1344 = vsub.f32 %v624, %v1343
    %v1345 = vand.u32 %v1344, 4294901760
    %1346 = vmatpush1.xpose.msra.mxu0 %v1345
    %1347 = vmatprep.subr.mxu0 0.0
    %v1348 = vand.u32 %v627, 4294901760
    %v1349 = vsub.f32 %v627, %v1348
    %v1350 = vand.u32 %v1349, 4294901760
    %1351 = vmatpush1.xpose.msra.mxu0 %v1350
    %1352 = vmatprep.subr.mxu0 0.0
    %v1353 = vand.u32 %v630, 4294901760
    %v1354 = vsub.f32 %v630, %v1353
    %v1355 = vand.u32 %v1354, 4294901760
    %1356 = vmatpush1.xpose.msra.mxu0 %v1355
    %1357 = vmatprep.subr.mxu0 0.0
    %v1358 = vand.u32 %v633, 4294901760
    %v1359 = vsub.f32 %v633, %v1358
    %v1360 = vand.u32 %v1359, 4294901760
    %1361 = vmatpush1.xpose.msra.mxu0 %v1360
    %1362 = vmatprep.subr.mxu0 0.0
    %v1363 = vand.u32 %v636, 4294901760
    %v1364 = vsub.f32 %v636, %v1363
    %v1365 = vand.u32 %v1364, 4294901760
    %1366 = vmatpush1.xpose.msra.mxu0 %v1365
    %1367 = vmatprep.subr.mxu0 0.0
    %v1368 = vand.u32 %v639, 4294901760
    %v1369 = vsub.f32 %v639, %v1368
    %v1370 = vand.u32 %v1369, 4294901760
    %1371 = vmatpush1.xpose.msra.mxu0 %v1370
    %1372 = vmatprep.subr.mxu0 0.0
    %v1373 = vand.u32 %v642, 4294901760
    %v1374 = vsub.f32 %v642, %v1373
    %v1375 = vand.u32 %v1374, 4294901760
    %1376 = vmatpush1.xpose.msra.mxu0 %v1375
    %1377 = vmatprep.subr.mxu0 0.0
    %v1378 = vand.u32 %v645, 4294901760
    %v1379 = vsub.f32 %v645, %v1378
    %v1380 = vand.u32 %v1379, 4294901760
    %1381 = vmatpush1.xpose.msra.mxu0 %v1380
    %1382 = vmatprep.subr.mxu0 0.0
    %v1383 = vand.u32 %v648, 4294901760
    %v1384 = vsub.f32 %v648, %v1383
    %v1385 = vand.u32 %v1384, 4294901760
    %1386 = vmatpush1.xpose.msra.mxu0 %v1385
    %1387 = vmatprep.subr.mxu0 0.0
    %v1388 = vand.u32 %v651, 4294901760
    %v1389 = vsub.f32 %v651, %v1388
    %v1390 = vand.u32 %v1389, 4294901760
    %1391 = vmatpush1.xpose.msra.mxu0 %v1390
    %1392 = vmatprep.subr.mxu0 0.0
    %v1393 = vand.u32 %v654, 4294901760
    %v1394 = vsub.f32 %v654, %v1393
    %v1395 = vand.u32 %v1394, 4294901760
    %1396 = vmatpush1.xpose.msra.mxu0 %v1395
    %1397 = vmatprep.subr.mxu0 0.0
    %v1398 = vand.u32 %v657, 4294901760
    %v1399 = vsub.f32 %v657, %v1398
    %v1400 = vand.u32 %v1399, 4294901760
    %1401 = vmatpush1.xpose.msra.mxu0 %v1400
    %1402 = vmatprep.mubr.f32.mxu0 0.0
    %v1403 = vand.u32 %v561, 4294901760
    %1404 = vmatmul.mubr.f32.gmra.mrb[0].mxu0 %v1403
    %v1405 = vpop.f32.mrb[0].mxu0
    %v1406 = vadd.f32 %v1238, %v1405
    %v1407 = vpop.f32.mrb[0].mxu0
    %v1408 = vadd.f32 %v1240, %v1407
    %1409 = vdwg.mxu0
    %1410 = vmatprep.subr.mxu0 0.0
    %v1411 = vand.u32 %v564, 4294901760
    %1412 = vmatpush1.xpose.msra.mxu0 %v1411
    %1413 = vmatprep.subr.mxu0 0.0
    %v1414 = vand.u32 %v567, 4294901760
    %1415 = vmatpush1.xpose.msra.mxu0 %v1414
    %1416 = vmatprep.subr.mxu0 0.0
    %v1417 = vand.u32 %v570, 4294901760
    %1418 = vmatpush1.xpose.msra.mxu0 %v1417
    %1419 = vmatprep.subr.mxu0 0.0
    %v1420 = vand.u32 %v573, 4294901760
    %1421 = vmatpush1.xpose.msra.mxu0 %v1420
    %1422 = vmatprep.subr.mxu0 0.0
    %v1423 = vand.u32 %v576, 4294901760
    %1424 = vmatpush1.xpose.msra.mxu0 %v1423
    %1425 = vmatprep.subr.mxu0 0.0
    %v1426 = vand.u32 %v579, 4294901760
    %1427 = vmatpush1.xpose.msra.mxu0 %v1426
    %1428 = vmatprep.subr.mxu0 0.0
    %v1429 = vand.u32 %v582, 4294901760
    %1430 = vmatpush1.xpose.msra.mxu0 %v1429
    %1431 = vmatprep.subr.mxu0 0.0
    %v1432 = vand.u32 %v585, 4294901760
    %1433 = vmatpush1.xpose.msra.mxu0 %v1432
    %1434 = vmatprep.subr.mxu0 0.0
    %v1435 = vand.u32 %v588, 4294901760
    %1436 = vmatpush1.xpose.msra.mxu0 %v1435
    %1437 = vmatprep.subr.mxu0 0.0
    %v1438 = vand.u32 %v591, 4294901760
    %1439 = vmatpush1.xpose.msra.mxu0 %v1438
    %1440 = vmatprep.subr.mxu0 0.0
    %v1441 = vand.u32 %v594, 4294901760
    %1442 = vmatpush1.xpose.msra.mxu0 %v1441
    %1443 = vmatprep.subr.mxu0 0.0
    %v1444 = vand.u32 %v597, 4294901760
    %1445 = vmatpush1.xpose.msra.mxu0 %v1444
    %1446 = vmatprep.subr.mxu0 0.0
    %v1447 = vand.u32 %v600, 4294901760
    %1448 = vmatpush1.xpose.msra.mxu0 %v1447
    %1449 = vmatprep.subr.mxu0 0.0
    %v1450 = vand.u32 %v603, 4294901760
    %1451 = vmatpush1.xpose.msra.mxu0 %v1450
    %1452 = vmatprep.subr.mxu0 0.0
    %v1453 = vand.u32 %v606, 4294901760
    %1454 = vmatpush1.xpose.msra.mxu0 %v1453
    %1455 = vmatprep.subr.mxu0 0.0
    %v1456 = vand.u32 %v609, 4294901760
    %1457 = vmatpush1.xpose.msra.mxu0 %v1456
    %1458 = vmatprep.subr.mxu0 0.0
    %v1459 = vand.u32 %v612, 4294901760
    %1460 = vmatpush1.xpose.msra.mxu0 %v1459
    %1461 = vmatprep.subr.mxu0 0.0
    %v1462 = vand.u32 %v615, 4294901760
    %1463 = vmatpush1.xpose.msra.mxu0 %v1462
    %1464 = vmatprep.subr.mxu0 0.0
    %v1465 = vand.u32 %v618, 4294901760
    %1466 = vmatpush1.xpose.msra.mxu0 %v1465
    %1467 = vmatprep.subr.mxu0 0.0
    %v1468 = vand.u32 %v621, 4294901760
    %1469 = vmatpush1.xpose.msra.mxu0 %v1468
    %1470 = vmatprep.subr.mxu0 0.0
    %v1471 = vand.u32 %v624, 4294901760
    %1472 = vmatpush1.xpose.msra.mxu0 %v1471
    %1473 = vmatprep.subr.mxu0 0.0
    %v1474 = vand.u32 %v627, 4294901760
    %1475 = vmatpush1.xpose.msra.mxu0 %v1474
    %1476 = vmatprep.subr.mxu0 0.0
    %v1477 = vand.u32 %v630, 4294901760
    %1478 = vmatpush1.xpose.msra.mxu0 %v1477
    %1479 = vmatprep.subr.mxu0 0.0
    %v1480 = vand.u32 %v633, 4294901760
    %1481 = vmatpush1.xpose.msra.mxu0 %v1480
    %1482 = vmatprep.subr.mxu0 0.0
    %v1483 = vand.u32 %v636, 4294901760
    %1484 = vmatpush1.xpose.msra.mxu0 %v1483
    %1485 = vmatprep.subr.mxu0 0.0
    %v1486 = vand.u32 %v639, 4294901760
    %1487 = vmatpush1.xpose.msra.mxu0 %v1486
    %1488 = vmatprep.subr.mxu0 0.0
    %v1489 = vand.u32 %v642, 4294901760
    %1490 = vmatpush1.xpose.msra.mxu0 %v1489
    %1491 = vmatprep.subr.mxu0 0.0
    %v1492 = vand.u32 %v645, 4294901760
    %1493 = vmatpush1.xpose.msra.mxu0 %v1492
    %1494 = vmatprep.subr.mxu0 0.0
    %v1495 = vand.u32 %v648, 4294901760
    %1496 = vmatpush1.xpose.msra.mxu0 %v1495
    %1497 = vmatprep.subr.mxu0 0.0
    %v1498 = vand.u32 %v651, 4294901760
    %1499 = vmatpush1.xpose.msra.mxu0 %v1498
    %1500 = vmatprep.subr.mxu0 0.0
    %v1501 = vand.u32 %v654, 4294901760
    %1502 = vmatpush1.xpose.msra.mxu0 %v1501
    %1503 = vmatprep.subr.mxu0 0.0
    %v1504 = vand.u32 %v657, 4294901760
    %1505 = vmatpush1.xpose.msra.mxu0 %v1504
    %1506 = vmatprep.mubr.f32.mxu0 0.0
    %v1507 = vand.u32 %v561, 4294901760
    %1508 = vmatmul.mubr.f32.gmra.mrb[0].mxu0 %v1507
    %v1509 = vpop.f32.mrb[0].mxu0
    %v1510 = vadd.f32 %v1406, %v1509
    %v1511 = vpop.f32.mrb[0].mxu0
    %v1512 = vadd.f32 %v1408, %v1511
    %1513 = vdwg.mxu0
    %v1514 = vld [vmem:[%s0] sm:$0xff]
    %v1515 = vld [vmem:[%s0 + $0x8] sm:$0xff]
    %v1516 = vmul.f32 %v1514, 0.17677669
    %v1517 = vmul.f32 %v1515, 0.17677669
    %v1519 = vsel %vm26, %v1516, 0
    %v1522 = vsel %vm26, %v1517, 0
    %v1525 = vsel %vm26, %v524, 0
    %1527 = vmatprep.subr.mxu0 0.0
    %v1528 = vand.u32 %v1525, 4294901760
    %1529 = vmatpush1.xpose.msra.mxu0 %v1528
    %1530 = vmatprep.subr.mxu0 0.0
    %1531 = vmatpush1.xpose.msra.mxu0 0.0
    %1532 = vmatprep.subr.mxu0 0.0
    %1533 = vmatpush1.xpose.msra.mxu0 0.0
    %1534 = vmatprep.subr.mxu0 0.0
    %1535 = vmatpush1.xpose.msra.mxu0 0.0
    %1536 = vmatprep.subr.mxu0 0.0
    %1537 = vmatpush1.xpose.msra.mxu0 0.0
    %1538 = vmatprep.subr.mxu0 0.0
    %1539 = vmatpush1.xpose.msra.mxu0 0.0
    %1540 = vmatprep.subr.mxu0 0.0
    %1541 = vmatpush1.xpose.msra.mxu0 0.0
    %1542 = vmatprep.subr.mxu0 0.0
    %1543 = vmatpush1.xpose.msra.mxu0 0.0
    %1544 = vmatprep.subr.mxu0 0.0
    %1545 = vmatpush1.xpose.msra.mxu0 0.0
    %1546 = vmatprep.subr.mxu0 0.0
    %1547 = vmatpush1.xpose.msra.mxu0 0.0
    %1548 = vmatprep.subr.mxu0 0.0
    %1549 = vmatpush1.xpose.msra.mxu0 0.0
    %1550 = vmatprep.subr.mxu0 0.0
    %1551 = vmatpush1.xpose.msra.mxu0 0.0
    %1552 = vmatprep.subr.mxu0 0.0
    %1553 = vmatpush1.xpose.msra.mxu0 0.0
    %1554 = vmatprep.subr.mxu0 0.0
    %1555 = vmatpush1.xpose.msra.mxu0 0.0
    %1556 = vmatprep.subr.mxu0 0.0
    %1557 = vmatpush1.xpose.msra.mxu0 0.0
    %1558 = vmatprep.subr.mxu0 0.0
    %1559 = vmatpush1.xpose.msra.mxu0 0.0
    %1560 = vmatprep.subr.mxu0 0.0
    %1561 = vmatpush1.xpose.msra.mxu0 0.0
    %1562 = vmatprep.subr.mxu0 0.0
    %1563 = vmatpush1.xpose.msra.mxu0 0.0
    %1564 = vmatprep.subr.mxu0 0.0
    %1565 = vmatpush1.xpose.msra.mxu0 0.0
    %1566 = vmatprep.subr.mxu0 0.0
    %1567 = vmatpush1.xpose.msra.mxu0 0.0
    %1568 = vmatprep.subr.mxu0 0.0
    %1569 = vmatpush1.xpose.msra.mxu0 0.0
    %1570 = vmatprep.subr.mxu0 0.0
    %1571 = vmatpush1.xpose.msra.mxu0 0.0
    %1572 = vmatprep.subr.mxu0 0.0
    %1573 = vmatpush1.xpose.msra.mxu0 0.0
    %1574 = vmatprep.subr.mxu0 0.0
    %1575 = vmatpush1.xpose.msra.mxu0 0.0
    %1576 = vmatprep.subr.mxu0 0.0
    %1577 = vmatpush1.xpose.msra.mxu0 0.0
    %1578 = vmatprep.subr.mxu0 0.0
    %1579 = vmatpush1.xpose.msra.mxu0 0.0
    %1580 = vmatprep.subr.mxu0 0.0
    %1581 = vmatpush1.xpose.msra.mxu0 0.0
    %1582 = vmatprep.subr.mxu0 0.0
    %1583 = vmatpush1.xpose.msra.mxu0 0.0
    %1584 = vmatprep.subr.mxu0 0.0
    %1585 = vmatpush1.xpose.msra.mxu0 0.0
    %1586 = vmatprep.subr.mxu0 0.0
    %1587 = vmatpush1.xpose.msra.mxu0 0.0
    %1588 = vmatprep.subr.mxu0 0.0
    %1589 = vmatpush1.xpose.msra.mxu0 0.0
    %1590 = vmatprep.subr.mxu0 0.0
    %1591 = vmatpush1.xpose.msra.mxu0 0.0
    %1592 = vmatprep.mubr.f32.mxu0 0.0
    %v1593 = vand.u32 %v1519, 4294901760
    %v1594 = vsub.f32 %v1519, %v1593
    %v1595 = vand.u32 %v1594, 4294901760
    %v1596 = vsub.f32 %v1594, %v1595
    %v1597 = vand.u32 %v1596, 4294901760
    %1598 = vmatmul.mubr.f32.gmra.mrb[0].mxu0 %v1597
    %v1599 = vpop.f32.mrb[0].mxu0
    %v1600 = vadd.f32 0.0, %v1599
    %v1601 = vpop.f32.mrb[0].mxu0
    %1602 = vmatprep.mubr.f32.mxu0 0.0
    %v1603 = vand.u32 %v1522, 4294901760
    %v1604 = vsub.f32 %v1522, %v1603
    %v1605 = vand.u32 %v1604, 4294901760
    %v1606 = vsub.f32 %v1604, %v1605
    %v1607 = vand.u32 %v1606, 4294901760
    %1608 = vmatmul.mubr.f32.gmra.mrb[0].mxu0 %v1607
    %v1609 = vpop.f32.mrb[0].mxu0
    %v1610 = vadd.f32 0.0, %v1609
    %v1611 = vpop.f32.mrb[0].mxu0
    %1612 = vdwg.mxu0
    %1613 = vmatprep.subr.mxu0 0.0
    %v1614 = vand.u32 %v1525, 4294901760
    %v1615 = vsub.f32 %v1525, %v1614
    %v1616 = vand.u32 %v1615, 4294901760
    %v1617 = vsub.f32 %v1615, %v1616
    %v1618 = vand.u32 %v1617, 4294901760
    %1619 = vmatpush1.xpose.msra.mxu0 %v1618
    %1620 = vmatprep.subr.mxu0 0.0
    %1621 = vmatpush1.xpose.msra.mxu0 0.0
    %1622 = vmatprep.subr.mxu0 0.0
    %1623 = vmatpush1.xpose.msra.mxu0 0.0
    %1624 = vmatprep.subr.mxu0 0.0
    %1625 = vmatpush1.xpose.msra.mxu0 0.0
    %1626 = vmatprep.subr.mxu0 0.0
    %1627 = vmatpush1.xpose.msra.mxu0 0.0
    %1628 = vmatprep.subr.mxu0 0.0
    %1629 = vmatpush1.xpose.msra.mxu0 0.0
    %1630 = vmatprep.subr.mxu0 0.0
    %1631 = vmatpush1.xpose.msra.mxu0 0.0
    %1632 = vmatprep.subr.mxu0 0.0
    %1633 = vmatpush1.xpose.msra.mxu0 0.0
    %1634 = vmatprep.subr.mxu0 0.0
    %1635 = vmatpush1.xpose.msra.mxu0 0.0
    %1636 = vmatprep.subr.mxu0 0.0
    %1637 = vmatpush1.xpose.msra.mxu0 0.0
    %1638 = vmatprep.subr.mxu0 0.0
    %1639 = vmatpush1.xpose.msra.mxu0 0.0
    %1640 = vmatprep.subr.mxu0 0.0
    %1641 = vmatpush1.xpose.msra.mxu0 0.0
    %1642 = vmatprep.subr.mxu0 0.0
    %1643 = vmatpush1.xpose.msra.mxu0 0.0
    %1644 = vmatprep.subr.mxu0 0.0
    %1645 = vmatpush1.xpose.msra.mxu0 0.0
    %1646 = vmatprep.subr.mxu0 0.0
    %1647 = vmatpush1.xpose.msra.mxu0 0.0
    %1648 = vmatprep.subr.mxu0 0.0
    %1649 = vmatpush1.xpose.msra.mxu0 0.0
    %1650 = vmatprep.subr.mxu0 0.0
    %1651 = vmatpush1.xpose.msra.mxu0 0.0
    %1652 = vmatprep.subr.mxu0 0.0
    %1653 = vmatpush1.xpose.msra.mxu0 0.0
    %1654 = vmatprep.subr.mxu0 0.0
    %1655 = vmatpush1.xpose.msra.mxu0 0.0
    %1656 = vmatprep.subr.mxu0 0.0
    %1657 = vmatpush1.xpose.msra.mxu0 0.0
    %1658 = vmatprep.subr.mxu0 0.0
    %1659 = vmatpush1.xpose.msra.mxu0 0.0
    %1660 = vmatprep.subr.mxu0 0.0
    %1661 = vmatpush1.xpose.msra.mxu0 0.0
    %1662 = vmatprep.subr.mxu0 0.0
    %1663 = vmatpush1.xpose.msra.mxu0 0.0
    %1664 = vmatprep.subr.mxu0 0.0
    %1665 = vmatpush1.xpose.msra.mxu0 0.0
    %1666 = vmatprep.subr.mxu0 0.0
    %1667 = vmatpush1.xpose.msra.mxu0 0.0
    %1668 = vmatprep.subr.mxu0 0.0
    %1669 = vmatpush1.xpose.msra.mxu0 0.0
    %1670 = vmatprep.subr.mxu0 0.0
    %1671 = vmatpush1.xpose.msra.mxu0 0.0
    %1672 = vmatprep.subr.mxu0 0.0
    %1673 = vmatpush1.xpose.msra.mxu0 0.0
    %1674 = vmatprep.subr.mxu0 0.0
    %1675 = vmatpush1.xpose.msra.mxu0 0.0
    %1676 = vmatprep.subr.mxu0 0.0
    %1677 = vmatpush1.xpose.msra.mxu0 0.0
    %1678 = vmatprep.subr.mxu0 0.0
    %1679 = vmatpush1.xpose.msra.mxu0 0.0
    %1680 = vmatprep.subr.mxu0 0.0
    %1681 = vmatpush1.xpose.msra.mxu0 0.0
    %1682 = vmatprep.mubr.f32.mxu0 0.0
    %v1683 = vand.u32 %v1519, 4294901760
    %1684 = vmatmul.mubr.f32.gmra.mrb[0].mxu0 %v1683
    %v1685 = vpop.f32.mrb[0].mxu0
    %v1686 = vadd.f32 %v1600, %v1685
    %v1687 = vpop.f32.mrb[0].mxu0
    %1688 = vmatprep.mubr.f32.mxu0 0.0
    %v1689 = vand.u32 %v1522, 4294901760
    %1690 = vmatmul.mubr.f32.gmra.mrb[0].mxu0 %v1689
    %v1691 = vpop.f32.mrb[0].mxu0
    %v1692 = vadd.f32 %v1610, %v1691
    %v1693 = vpop.f32.mrb[0].mxu0
    %1694 = vdwg.mxu0
    %1695 = vmatprep.subr.mxu0 0.0
    %v1696 = vand.u32 %v1525, 4294901760
    %v1697 = vsub.f32 %v1525, %v1696
    %1698 = vmatpush1.xpose.msra.mxu0 %v1697
    %1699 = vmatprep.subr.mxu0 0.0
    %1700 = vmatpush1.xpose.msra.mxu0 0.0
    %1701 = vmatprep.subr.mxu0 0.0
    %1702 = vmatpush1.xpose.msra.mxu0 0.0
    %1703 = vmatprep.subr.mxu0 0.0
    %1704 = vmatpush1.xpose.msra.mxu0 0.0
    %1705 = vmatprep.subr.mxu0 0.0
    %1706 = vmatpush1.xpose.msra.mxu0 0.0
    %1707 = vmatprep.subr.mxu0 0.0
    %1708 = vmatpush1.xpose.msra.mxu0 0.0
    %1709 = vmatprep.subr.mxu0 0.0
    %1710 = vmatpush1.xpose.msra.mxu0 0.0
    %1711 = vmatprep.subr.mxu0 0.0
    %1712 = vmatpush1.xpose.msra.mxu0 0.0
    %1713 = vmatprep.subr.mxu0 0.0
    %1714 = vmatpush1.xpose.msra.mxu0 0.0
    %1715 = vmatprep.subr.mxu0 0.0
    %1716 = vmatpush1.xpose.msra.mxu0 0.0
    %1717 = vmatprep.subr.mxu0 0.0
    %1718 = vmatpush1.xpose.msra.mxu0 0.0
    %1719 = vmatprep.subr.mxu0 0.0
    %1720 = vmatpush1.xpose.msra.mxu0 0.0
    %1721 = vmatprep.subr.mxu0 0.0
    %1722 = vmatpush1.xpose.msra.mxu0 0.0
    %1723 = vmatprep.subr.mxu0 0.0
    %1724 = vmatpush1.xpose.msra.mxu0 0.0
    %1725 = vmatprep.subr.mxu0 0.0
    %1726 = vmatpush1.xpose.msra.mxu0 0.0
    %1727 = vmatprep.subr.mxu0 0.0
    %1728 = vmatpush1.xpose.msra.mxu0 0.0
    %1729 = vmatprep.subr.mxu0 0.0
    %1730 = vmatpush1.xpose.msra.mxu0 0.0
    %1731 = vmatprep.subr.mxu0 0.0
    %1732 = vmatpush1.xpose.msra.mxu0 0.0
    %1733 = vmatprep.subr.mxu0 0.0
    %1734 = vmatpush1.xpose.msra.mxu0 0.0
    %1735 = vmatprep.subr.mxu0 0.0
    %1736 = vmatpush1.xpose.msra.mxu0 0.0
    %1737 = vmatprep.subr.mxu0 0.0
    %1738 = vmatpush1.xpose.msra.mxu0 0.0
    %1739 = vmatprep.subr.mxu0 0.0
    %1740 = vmatpush1.xpose.msra.mxu0 0.0
    %1741 = vmatprep.subr.mxu0 0.0
    %1742 = vmatpush1.xpose.msra.mxu0 0.0
    %1743 = vmatprep.subr.mxu0 0.0
    %1744 = vmatpush1.xpose.msra.mxu0 0.0
    %1745 = vmatprep.subr.mxu0 0.0
    %1746 = vmatpush1.xpose.msra.mxu0 0.0
    %1747 = vmatprep.subr.mxu0 0.0
    %1748 = vmatpush1.xpose.msra.mxu0 0.0
    %1749 = vmatprep.subr.mxu0 0.0
    %1750 = vmatpush1.xpose.msra.mxu0 0.0
    %1751 = vmatprep.subr.mxu0 0.0
    %1752 = vmatpush1.xpose.msra.mxu0 0.0
    %1753 = vmatprep.subr.mxu0 0.0
    %1754 = vmatpush1.xpose.msra.mxu0 0.0
    %1755 = vmatprep.subr.mxu0 0.0
    %1756 = vmatpush1.xpose.msra.mxu0 0.0
    %1757 = vmatprep.subr.mxu0 0.0
    %1758 = vmatpush1.xpose.msra.mxu0 0.0
    %1759 = vmatprep.subr.mxu0 0.0
    %1760 = vmatpush1.xpose.msra.mxu0 0.0
    %1761 = vmatprep.mubr.f32.mxu0 0.0
    %v1762 = vand.u32 %v1519, 4294901760
    %v1763 = vsub.f32 %v1519, %v1762
    %1764 = vmatmul.mubr.f32.gmra.mrb[0].mxu0 %v1763
    %v1765 = vpop.f32.mrb[0].mxu0
    %v1766 = vadd.f32 %v1686, %v1765
    %v1767 = vpop.f32.mrb[0].mxu0
    %1768 = vmatprep.mubr.f32.mxu0 0.0
    %v1769 = vand.u32 %v1522, 4294901760
    %v1770 = vsub.f32 %v1522, %v1769
    %1771 = vmatmul.mubr.f32.gmra.mrb[0].mxu0 %v1770
    %v1772 = vpop.f32.mrb[0].mxu0
    %v1773 = vadd.f32 %v1692, %v1772
    %v1774 = vpop.f32.mrb[0].mxu0
    %1775 = vdwg.mxu0
    %1776 = vmatprep.subr.mxu0 0.0
    %v1777 = vand.u32 %v1525, 4294901760
    %1778 = vmatpush1.xpose.msra.mxu0 %v1777
    %1779 = vmatprep.subr.mxu0 0.0
    %1780 = vmatpush1.xpose.msra.mxu0 0.0
    %1781 = vmatprep.subr.mxu0 0.0
    %1782 = vmatpush1.xpose.msra.mxu0 0.0
    %1783 = vmatprep.subr.mxu0 0.0
    %1784 = vmatpush1.xpose.msra.mxu0 0.0
    %1785 = vmatprep.subr.mxu0 0.0
    %1786 = vmatpush1.xpose.msra.mxu0 0.0
    %1787 = vmatprep.subr.mxu0 0.0
    %1788 = vmatpush1.xpose.msra.mxu0 0.0
    %1789 = vmatprep.subr.mxu0 0.0
    %1790 = vmatpush1.xpose.msra.mxu0 0.0
    %1791 = vmatprep.subr.mxu0 0.0
    %1792 = vmatpush1.xpose.msra.mxu0 0.0
    %1793 = vmatprep.subr.mxu0 0.0
    %1794 = vmatpush1.xpose.msra.mxu0 0.0
    %1795 = vmatprep.subr.mxu0 0.0
    %1796 = vmatpush1.xpose.msra.mxu0 0.0
    %1797 = vmatprep.subr.mxu0 0.0
    %1798 = vmatpush1.xpose.msra.mxu0 0.0
    %1799 = vmatprep.subr.mxu0 0.0
    %1800 = vmatpush1.xpose.msra.mxu0 0.0
    %1801 = vmatprep.subr.mxu0 0.0
    %1802 = vmatpush1.xpose.msra.mxu0 0.0
    %1803 = vmatprep.subr.mxu0 0.0
    %1804 = vmatpush1.xpose.msra.mxu0 0.0
    %1805 = vmatprep.subr.mxu0 0.0
    %1806 = vmatpush1.xpose.msra.mxu0 0.0
    %1807 = vmatprep.subr.mxu0 0.0
    %1808 = vmatpush1.xpose.msra.mxu0 0.0
    %1809 = vmatprep.subr.mxu0 0.0
    %1810 = vmatpush1.xpose.msra.mxu0 0.0
    %1811 = vmatprep.subr.mxu0 0.0
    %1812 = vmatpush1.xpose.msra.mxu0 0.0
    %1813 = vmatprep.subr.mxu0 0.0
    %1814 = vmatpush1.xpose.msra.mxu0 0.0
    %1815 = vmatprep.subr.mxu0 0.0
    %1816 = vmatpush1.xpose.msra.mxu0 0.0
    %1817 = vmatprep.subr.mxu0 0.0
    %1818 = vmatpush1.xpose.msra.mxu0 0.0
    %1819 = vmatprep.subr.mxu0 0.0
    %1820 = vmatpush1.xpose.msra.mxu0 0.0
    %1821 = vmatprep.subr.mxu0 0.0
    %1822 = vmatpush1.xpose.msra.mxu0 0.0
    %1823 = vmatprep.subr.mxu0 0.0
    %1824 = vmatpush1.xpose.msra.mxu0 0.0
    %1825 = vmatprep.subr.mxu0 0.0
    %1826 = vmatpush1.xpose.msra.mxu0 0.0
    %1827 = vmatprep.subr.mxu0 0.0
    %1828 = vmatpush1.xpose.msra.mxu0 0.0
    %1829 = vmatprep.subr.mxu0 0.0
    %1830 = vmatpush1.xpose.msra.mxu0 0.0
    %1831 = vmatprep.subr.mxu0 0.0
    %1832 = vmatpush1.xpose.msra.mxu0 0.0
    %1833 = vmatprep.subr.mxu0 0.0
    %1834 = vmatpush1.xpose.msra.mxu0 0.0
    %1835 = vmatprep.subr.mxu0 0.0
    %1836 = vmatpush1.xpose.msra.mxu0 0.0
    %1837 = vmatprep.subr.mxu0 0.0
    %1838 = vmatpush1.xpose.msra.mxu0 0.0
    %1839 = vmatprep.subr.mxu0 0.0
    %1840 = vmatpush1.xpose.msra.mxu0 0.0
    %1841 = vmatprep.mubr.f32.mxu0 0.0
    %v1842 = vand.u32 %v1519, 4294901760
    %v1843 = vsub.f32 %v1519, %v1842
    %v1844 = vand.u32 %v1843, 4294901760
    %1845 = vmatmul.mubr.f32.gmra.mrb[0].mxu0 %v1844
    %v1846 = vpop.f32.mrb[0].mxu0
    %v1847 = vadd.f32 %v1766, %v1846
    %v1848 = vpop.f32.mrb[0].mxu0
    %1849 = vmatprep.mubr.f32.mxu0 0.0
    %v1850 = vand.u32 %v1522, 4294901760
    %v1851 = vsub.f32 %v1522, %v1850
    %v1852 = vand.u32 %v1851, 4294901760
    %1853 = vmatmul.mubr.f32.gmra.mrb[0].mxu0 %v1852
    %v1854 = vpop.f32.mrb[0].mxu0
    %v1855 = vadd.f32 %v1773, %v1854
    %v1856 = vpop.f32.mrb[0].mxu0
    %1857 = vdwg.mxu0
    %1858 = vmatprep.subr.mxu0 0.0
    %v1859 = vand.u32 %v1525, 4294901760
    %v1860 = vsub.f32 %v1525, %v1859
    %v1861 = vand.u32 %v1860, 4294901760
    %1862 = vmatpush1.xpose.msra.mxu0 %v1861
    %1863 = vmatprep.subr.mxu0 0.0
    %1864 = vmatpush1.xpose.msra.mxu0 0.0
    %1865 = vmatprep.subr.mxu0 0.0
    %1866 = vmatpush1.xpose.msra.mxu0 0.0
    %1867 = vmatprep.subr.mxu0 0.0
    %1868 = vmatpush1.xpose.msra.mxu0 0.0
    %1869 = vmatprep.subr.mxu0 0.0
    %1870 = vmatpush1.xpose.msra.mxu0 0.0
    %1871 = vmatprep.subr.mxu0 0.0
    %1872 = vmatpush1.xpose.msra.mxu0 0.0
    %1873 = vmatprep.subr.mxu0 0.0
    %1874 = vmatpush1.xpose.msra.mxu0 0.0
    %1875 = vmatprep.subr.mxu0 0.0
    %1876 = vmatpush1.xpose.msra.mxu0 0.0
    %1877 = vmatprep.subr.mxu0 0.0
    %1878 = vmatpush1.xpose.msra.mxu0 0.0
    %1879 = vmatprep.subr.mxu0 0.0
    %1880 = vmatpush1.xpose.msra.mxu0 0.0
    %1881 = vmatprep.subr.mxu0 0.0
    %1882 = vmatpush1.xpose.msra.mxu0 0.0
    %1883 = vmatprep.subr.mxu0 0.0
    %1884 = vmatpush1.xpose.msra.mxu0 0.0
    %1885 = vmatprep.subr.mxu0 0.0
    %1886 = vmatpush1.xpose.msra.mxu0 0.0
    %1887 = vmatprep.subr.mxu0 0.0
    %1888 = vmatpush1.xpose.msra.mxu0 0.0
    %1889 = vmatprep.subr.mxu0 0.0
    %1890 = vmatpush1.xpose.msra.mxu0 0.0
    %1891 = vmatprep.subr.mxu0 0.0
    %1892 = vmatpush1.xpose.msra.mxu0 0.0
    %1893 = vmatprep.subr.mxu0 0.0
    %1894 = vmatpush1.xpose.msra.mxu0 0.0
    %1895 = vmatprep.subr.mxu0 0.0
    %1896 = vmatpush1.xpose.msra.mxu0 0.0
    %1897 = vmatprep.subr.mxu0 0.0
    %1898 = vmatpush1.xpose.msra.mxu0 0.0
    %1899 = vmatprep.subr.mxu0 0.0
    %1900 = vmatpush1.xpose.msra.mxu0 0.0
    %1901 = vmatprep.subr.mxu0 0.0
    %1902 = vmatpush1.xpose.msra.mxu0 0.0
    %1903 = vmatprep.subr.mxu0 0.0
    %1904 = vmatpush1.xpose.msra.mxu0 0.0
    %1905 = vmatprep.subr.mxu0 0.0
    %1906 = vmatpush1.xpose.msra.mxu0 0.0
    %1907 = vmatprep.subr.mxu0 0.0
    %1908 = vmatpush1.xpose.msra.mxu0 0.0
    %1909 = vmatprep.subr.mxu0 0.0
    %1910 = vmatpush1.xpose.msra.mxu0 0.0
    %1911 = vmatprep.subr.mxu0 0.0
    %1912 = vmatpush1.xpose.msra.mxu0 0.0
    %1913 = vmatprep.subr.mxu0 0.0
    %1914 = vmatpush1.xpose.msra.mxu0 0.0
    %1915 = vmatprep.subr.mxu0 0.0
    %1916 = vmatpush1.xpose.msra.mxu0 0.0
    %1917 = vmatprep.subr.mxu0 0.0
    %1918 = vmatpush1.xpose.msra.mxu0 0.0
    %1919 = vmatprep.subr.mxu0 0.0
    %1920 = vmatpush1.xpose.msra.mxu0 0.0
    %1921 = vmatprep.subr.mxu0 0.0
    %1922 = vmatpush1.xpose.msra.mxu0 0.0
    %1923 = vmatprep.subr.mxu0 0.0
    %1924 = vmatpush1.xpose.msra.mxu0 0.0
    %1925 = vmatprep.mubr.f32.mxu0 0.0
    %v1926 = vand.u32 %v1519, 4294901760
    %1927 = vmatmul.mubr.f32.gmra.mrb[0].mxu0 %v1926
    %v1928 = vpop.f32.mrb[0].mxu0
    %v1929 = vadd.f32 %v1847, %v1928
    %v1930 = vpop.f32.mrb[0].mxu0
    %1931 = vmatprep.mubr.f32.mxu0 0.0
    %v1932 = vand.u32 %v1522, 4294901760
    %1933 = vmatmul.mubr.f32.gmra.mrb[0].mxu0 %v1932
    %v1934 = vpop.f32.mrb[0].mxu0
    %v1935 = vadd.f32 %v1855, %v1934
    %v1936 = vpop.f32.mrb[0].mxu0
    %1937 = vdwg.mxu0
    %1938 = vmatprep.subr.mxu0 0.0
    %v1939 = vand.u32 %v1525, 4294901760
    %1940 = vmatpush1.xpose.msra.mxu0 %v1939
    %1941 = vmatprep.subr.mxu0 0.0
    %1942 = vmatpush1.xpose.msra.mxu0 0.0
    %1943 = vmatprep.subr.mxu0 0.0
    %1944 = vmatpush1.xpose.msra.mxu0 0.0
    %1945 = vmatprep.subr.mxu0 0.0
    %1946 = vmatpush1.xpose.msra.mxu0 0.0
    %1947 = vmatprep.subr.mxu0 0.0
    %1948 = vmatpush1.xpose.msra.mxu0 0.0
    %1949 = vmatprep.subr.mxu0 0.0
    %1950 = vmatpush1.xpose.msra.mxu0 0.0
    %1951 = vmatprep.subr.mxu0 0.0
    %1952 = vmatpush1.xpose.msra.mxu0 0.0
    %1953 = vmatprep.subr.mxu0 0.0
    %1954 = vmatpush1.xpose.msra.mxu0 0.0
    %1955 = vmatprep.subr.mxu0 0.0
    %1956 = vmatpush1.xpose.msra.mxu0 0.0
    %1957 = vmatprep.subr.mxu0 0.0
    %1958 = vmatpush1.xpose.msra.mxu0 0.0
    %1959 = vmatprep.subr.mxu0 0.0
    %1960 = vmatpush1.xpose.msra.mxu0 0.0
    %1961 = vmatprep.subr.mxu0 0.0
    %1962 = vmatpush1.xpose.msra.mxu0 0.0
    %1963 = vmatprep.subr.mxu0 0.0
    %1964 = vmatpush1.xpose.msra.mxu0 0.0
    %1965 = vmatprep.subr.mxu0 0.0
    %1966 = vmatpush1.xpose.msra.mxu0 0.0
    %1967 = vmatprep.subr.mxu0 0.0
    %1968 = vmatpush1.xpose.msra.mxu0 0.0
    %1969 = vmatprep.subr.mxu0 0.0
    %1970 = vmatpush1.xpose.msra.mxu0 0.0
    %1971 = vmatprep.subr.mxu0 0.0
    %1972 = vmatpush1.xpose.msra.mxu0 0.0
    %1973 = vmatprep.subr.mxu0 0.0
    %1974 = vmatpush1.xpose.msra.mxu0 0.0
    %1975 = vmatprep.subr.mxu0 0.0
    %1976 = vmatpush1.xpose.msra.mxu0 0.0
    %1977 = vmatprep.subr.mxu0 0.0
    %1978 = vmatpush1.xpose.msra.mxu0 0.0
    %1979 = vmatprep.subr.mxu0 0.0
    %1980 = vmatpush1.xpose.msra.mxu0 0.0
    %1981 = vmatprep.subr.mxu0 0.0
    %1982 = vmatpush1.xpose.msra.mxu0 0.0
    %1983 = vmatprep.subr.mxu0 0.0
    %1984 = vmatpush1.xpose.msra.mxu0 0.0
    %1985 = vmatprep.subr.mxu0 0.0
    %1986 = vmatpush1.xpose.msra.mxu0 0.0
    %1987 = vmatprep.subr.mxu0 0.0
    %1988 = vmatpush1.xpose.msra.mxu0 0.0
    %1989 = vmatprep.subr.mxu0 0.0
    %1990 = vmatpush1.xpose.msra.mxu0 0.0
    %1991 = vmatprep.subr.mxu0 0.0
    %1992 = vmatpush1.xpose.msra.mxu0 0.0
    %1993 = vmatprep.subr.mxu0 0.0
    %1994 = vmatpush1.xpose.msra.mxu0 0.0
    %1995 = vmatprep.subr.mxu0 0.0
    %1996 = vmatpush1.xpose.msra.mxu0 0.0
    %1997 = vmatprep.subr.mxu0 0.0
    %1998 = vmatpush1.xpose.msra.mxu0 0.0
    %1999 = vmatprep.subr.mxu0 0.0
    %2000 = vmatpush1.xpose.msra.mxu0 0.0
    %2001 = vmatprep.subr.mxu0 0.0
    %2002 = vmatpush1.xpose.msra.mxu0 0.0
    %2003 = vmatprep.mubr.f32.mxu0 0.0
    %v2004 = vand.u32 %v1519, 4294901760
    %2005 = vmatmul.mubr.f32.gmra.mrb[0].mxu0 %v2004
    %v2006 = vpop.f32.mrb[0].mxu0
    %v2007 = vadd.f32 %v1929, %v2006
    %v2008 = vpop.f32.mrb[0].mxu0
    %2009 = vmatprep.mubr.f32.mxu0 0.0
    %v2010 = vand.u32 %v1522, 4294901760
    %2011 = vmatmul.mubr.f32.gmra.mrb[0].mxu0 %v2010
    %v2012 = vpop.f32.mrb[0].mxu0
    %v2013 = vadd.f32 %v1935, %v2012
    %v2014 = vpop.f32.mrb[0].mxu0
    %2015 = vdwg.mxu0
    %vm2016 = vcmask 64512
    %v2017 = vsel %vm2016, %v2007, -inf
    %2018 = vmax.xlane.f32.xlu0 %v2017
    %v2019 = vpop.xlane.xlu0 %2018
    %v2020 = vsel %vm2016, %v2013, -inf
    %2021 = vmax.xlane.f32.xlu0 %v2020
    %v2022 = vpop.xlane.xlu0 %2021
    %v2023 = vsub.f32 %v2007, %v2019
    %v2024 = vsub.f32 %v2013, %v2022
    %v2025 = vmul.f32 %v2023, 1.442695
    %v2026 = vpow.pop %v2025
    %v2027 = vmul.f32 %v2024, 1.442695
    %v2028 = vpow.pop %v2027
    %v2029 = vsel %vm2016, %v2026, 0.0
    %2030 = vadd.xlane.f32.xlu0 %v2029
    %v2031 = vpop.xlane.xlu0 %2030
    %v2032 = vsel %vm2016, %v2028, 0.0
    %2033 = vadd.xlane.f32.xlu0 %v2032
    %v2034 = vpop.xlane.xlu0 %2033
    %v2035 = vrcp.pop %v2031
    %v2036 = vmul.f32 %v2026, %v2035
    %v2037 = vrcp.pop %v2034
    %v2038 = vmul.f32 %v2028, %v2037
    %v2040 = vsel %vm2016, %v2036, 0
    %v2043 = vsel %vm2016, %v2038, 0
    %v2045 = vand.u32 %v1512, 4294901760
    %2046 = vmatprep.subr.mxu0 %v2045
    %v2047 = vand.u32 %v1510, 4294901760
    %2048 = vmatpush1.msra.mxu0 %v2047
    %2049 = vmatprep.subr.mxu0 0.0
    %2050 = vmatpush1.msra.mxu0 0.0
    %2051 = vmatprep.subr.mxu0 0.0
    %2052 = vmatpush1.msra.mxu0 0.0
    %2053 = vmatprep.subr.mxu0 0.0
    %2054 = vmatpush1.msra.mxu0 0.0
    %2055 = vmatprep.subr.mxu0 0.0
    %2056 = vmatpush1.msra.mxu0 0.0
    %2057 = vmatprep.subr.mxu0 0.0
    %2058 = vmatpush1.msra.mxu0 0.0
    %2059 = vmatprep.subr.mxu0 0.0
    %2060 = vmatpush1.msra.mxu0 0.0
    %2061 = vmatprep.subr.mxu0 0.0
    %2062 = vmatpush1.msra.mxu0 0.0
    %2063 = vmatprep.subr.mxu0 0.0
    %2064 = vmatpush1.msra.mxu0 0.0
    %2065 = vmatprep.subr.mxu0 0.0
    %2066 = vmatpush1.msra.mxu0 0.0
    %2067 = vmatprep.subr.mxu0 0.0
    %2068 = vmatpush1.msra.mxu0 0.0
    %2069 = vmatprep.subr.mxu0 0.0
    %2070 = vmatpush1.msra.mxu0 0.0
    %2071 = vmatprep.subr.mxu0 0.0
    %2072 = vmatpush1.msra.mxu0 0.0
    %2073 = vmatprep.subr.mxu0 0.0
    %2074 = vmatpush1.msra.mxu0 0.0
    %2075 = vmatprep.subr.mxu0 0.0
    %2076 = vmatpush1.msra.mxu0 0.0
    %2077 = vmatprep.subr.mxu0 0.0
    %2078 = vmatpush1.msra.mxu0 0.0
    %2079 = vmatprep.subr.mxu0 0.0
    %2080 = vmatpush1.msra.mxu0 0.0
    %2081 = vmatprep.subr.mxu0 0.0
    %2082 = vmatpush1.msra.mxu0 0.0
    %2083 = vmatprep.subr.mxu0 0.0
    %2084 = vmatpush1.msra.mxu0 0.0
    %2085 = vmatprep.subr.mxu0 0.0
    %2086 = vmatpush1.msra.mxu0 0.0
    %2087 = vmatprep.subr.mxu0 0.0
    %2088 = vmatpush1.msra.mxu0 0.0
    %2089 = vmatprep.subr.mxu0 0.0
    %2090 = vmatpush1.msra.mxu0 0.0
    %2091 = vmatprep.subr.mxu0 0.0
    %2092 = vmatpush1.msra.mxu0 0.0
    %2093 = vmatprep.subr.mxu0 0.0
    %2094 = vmatpush1.msra.mxu0 0.0
    %2095 = vmatprep.subr.mxu0 0.0
    %2096 = vmatpush1.msra.mxu0 0.0
    %2097 = vmatprep.subr.mxu0 0.0
    %2098 = vmatpush1.msra.mxu0 0.0
    %2099 = vmatprep.subr.mxu0 0.0
    %2100 = vmatpush1.msra.mxu0 0.0
    %2101 = vmatprep.subr.mxu0 0.0
    %2102 = vmatpush1.msra.mxu0 0.0
    %2103 = vmatprep.subr.mxu0 0.0
    %2104 = vmatpush1.msra.mxu0 0.0
    %2105 = vmatprep.subr.mxu0 0.0
    %2106 = vmatpush1.msra.mxu0 0.0
    %2107 = vmatprep.subr.mxu0 0.0
    %2108 = vmatpush1.msra.mxu0 0.0
    %2109 = vmatprep.subr.mxu0 0.0
    %2110 = vmatpush1.msra.mxu0 0.0
    %2111 = vmatprep.mubr.f32.mxu0 0.0
    %v2112 = vand.u32 %v2040, 4294901760
    %v2113 = vsub.f32 %v2040, %v2112
    %v2114 = vand.u32 %v2113, 4294901760
    %v2115 = vsub.f32 %v2113, %v2114
    %v2116 = vand.u32 %v2115, 4294901760
    %2117 = vmatmul.mubr.f32.gmra.mrb[0].mxu0 %v2116
    %v2118 = vpop.f32.mrb[0].mxu0
    %v2119 = vadd.f32 0.0, %v2118
    %v2120 = vpop.f32.mrb[0].mxu0
    %v2121 = vadd.f32 0.0, %v2120
    %2122 = vmatprep.mubr.f32.mxu0 0.0
    %v2123 = vand.u32 %v2043, 4294901760
    %v2124 = vsub.f32 %v2043, %v2123
    %v2125 = vand.u32 %v2124, 4294901760
    %v2126 = vsub.f32 %v2124, %v2125
    %v2127 = vand.u32 %v2126, 4294901760
    %2128 = vmatmul.mubr.f32.gmra.mrb[0].mxu0 %v2127
    %v2129 = vpop.f32.mrb[0].mxu0
    %v2130 = vadd.f32 0.0, %v2129
    %v2131 = vpop.f32.mrb[0].mxu0
    %v2132 = vadd.f32 0.0, %v2131
    %2133 = vdwg.mxu0
    %v2134 = vand.u32 %v1512, 4294901760
    %v2135 = vsub.f32 %v1512, %v2134
    %v2136 = vand.u32 %v2135, 4294901760
    %v2137 = vsub.f32 %v2135, %v2136
    %v2138 = vand.u32 %v2137, 4294901760
    %2139 = vmatprep.subr.mxu0 %v2138
    %v2140 = vand.u32 %v1510, 4294901760
    %v2141 = vsub.f32 %v1510, %v2140
    %v2142 = vand.u32 %v2141, 4294901760
    %v2143 = vsub.f32 %v2141, %v2142
    %v2144 = vand.u32 %v2143, 4294901760
    %2145 = vmatpush1.msra.mxu0 %v2144
    %2146 = vmatprep.subr.mxu0 0.0
    %2147 = vmatpush1.msra.mxu0 0.0
    %2148 = vmatprep.subr.mxu0 0.0
    %2149 = vmatpush1.msra.mxu0 0.0
    %2150 = vmatprep.subr.mxu0 0.0
    %2151 = vmatpush1.msra.mxu0 0.0
    %2152 = vmatprep.subr.mxu0 0.0
    %2153 = vmatpush1.msra.mxu0 0.0
    %2154 = vmatprep.subr.mxu0 0.0
    %2155 = vmatpush1.msra.mxu0 0.0
    %2156 = vmatprep.subr.mxu0 0.0
    %2157 = vmatpush1.msra.mxu0 0.0
    %2158 = vmatprep.subr.mxu0 0.0
    %2159 = vmatpush1.msra.mxu0 0.0
    %2160 = vmatprep.subr.mxu0 0.0
    %2161 = vmatpush1.msra.mxu0 0.0
    %2162 = vmatprep.subr.mxu0 0.0
    %2163 = vmatpush1.msra.mxu0 0.0
    %2164 = vmatprep.subr.mxu0 0.0
    %2165 = vmatpush1.msra.mxu0 0.0
    %2166 = vmatprep.subr.mxu0 0.0
    %2167 = vmatpush1.msra.mxu0 0.0
    %2168 = vmatprep.subr.mxu0 0.0
    %2169 = vmatpush1.msra.mxu0 0.0
    %2170 = vmatprep.subr.mxu0 0.0
    %2171 = vmatpush1.msra.mxu0 0.0
    %2172 = vmatprep.subr.mxu0 0.0
    %2173 = vmatpush1.msra.mxu0 0.0
    %2174 = vmatprep.subr.mxu0 0.0
    %2175 = vmatpush1.msra.mxu0 0.0
    %2176 = vmatprep.subr.mxu0 0.0
    %2177 = vmatpush1.msra.mxu0 0.0
    %2178 = vmatprep.subr.mxu0 0.0
    %2179 = vmatpush1.msra.mxu0 0.0
    %2180 = vmatprep.subr.mxu0 0.0
    %2181 = vmatpush1.msra.mxu0 0.0
    %2182 = vmatprep.subr.mxu0 0.0
    %2183 = vmatpush1.msra.mxu0 0.0
    %2184 = vmatprep.subr.mxu0 0.0
    %2185 = vmatpush1.msra.mxu0 0.0
    %2186 = vmatprep.subr.mxu0 0.0
    %2187 = vmatpush1.msra.mxu0 0.0
    %2188 = vmatprep.subr.mxu0 0.0
    %2189 = vmatpush1.msra.mxu0 0.0
    %2190 = vmatprep.subr.mxu0 0.0
    %2191 = vmatpush1.msra.mxu0 0.0
    %2192 = vmatprep.subr.mxu0 0.0
    %2193 = vmatpush1.msra.mxu0 0.0
    %2194 = vmatprep.subr.mxu0 0.0
    %2195 = vmatpush1.msra.mxu0 0.0
    %2196 = vmatprep.subr.mxu0 0.0
    %2197 = vmatpush1.msra.mxu0 0.0
    %2198 = vmatprep.subr.mxu0 0.0
    %2199 = vmatpush1.msra.mxu0 0.0
    %2200 = vmatprep.subr.mxu0 0.0
    %2201 = vmatpush1.msra.mxu0 0.0
    %2202 = vmatprep.subr.mxu0 0.0
    %2203 = vmatpush1.msra.mxu0 0.0
    %2204 = vmatprep.subr.mxu0 0.0
    %2205 = vmatpush1.msra.mxu0 0.0
    %2206 = vmatprep.subr.mxu0 0.0
    %2207 = vmatpush1.msra.mxu0 0.0
    %2208 = vmatprep.mubr.f32.mxu0 0.0
    %v2209 = vand.u32 %v2040, 4294901760
    %2210 = vmatmul.mubr.f32.gmra.mrb[0].mxu0 %v2209
    %v2211 = vpop.f32.mrb[0].mxu0
    %v2212 = vadd.f32 %v2119, %v2211
    %v2213 = vpop.f32.mrb[0].mxu0
    %v2214 = vadd.f32 %v2121, %v2213
    %2215 = vmatprep.mubr.f32.mxu0 0.0
    %v2216 = vand.u32 %v2043, 4294901760
    %2217 = vmatmul.mubr.f32.gmra.mrb[0].mxu0 %v2216
    %v2218 = vpop.f32.mrb[0].mxu0
    %v2219 = vadd.f32 %v2130, %v2218
    %v2220 = vpop.f32.mrb[0].mxu0
    %v2221 = vadd.f32 %v2132, %v2220
    %2222 = vdwg.mxu0
    %v2223 = vand.u32 %v1512, 4294901760
    %v2224 = vsub.f32 %v1512, %v2223
    %2225 = vmatprep.subr.mxu0 %v2224
    %v2226 = vand.u32 %v1510, 4294901760
    %v2227 = vsub.f32 %v1510, %v2226
    %2228 = vmatpush1.msra.mxu0 %v2227
    %2229 = vmatprep.subr.mxu0 0.0
    %2230 = vmatpush1.msra.mxu0 0.0
    %2231 = vmatprep.subr.mxu0 0.0
    %2232 = vmatpush1.msra.mxu0 0.0
    %2233 = vmatprep.subr.mxu0 0.0
    %2234 = vmatpush1.msra.mxu0 0.0
    %2235 = vmatprep.subr.mxu0 0.0
    %2236 = vmatpush1.msra.mxu0 0.0
    %2237 = vmatprep.subr.mxu0 0.0
    %2238 = vmatpush1.msra.mxu0 0.0
    %2239 = vmatprep.subr.mxu0 0.0
    %2240 = vmatpush1.msra.mxu0 0.0
    %2241 = vmatprep.subr.mxu0 0.0
    %2242 = vmatpush1.msra.mxu0 0.0
    %2243 = vmatprep.subr.mxu0 0.0
    %2244 = vmatpush1.msra.mxu0 0.0
    %2245 = vmatprep.subr.mxu0 0.0
    %2246 = vmatpush1.msra.mxu0 0.0
    %2247 = vmatprep.subr.mxu0 0.0
    %2248 = vmatpush1.msra.mxu0 0.0
    %2249 = vmatprep.subr.mxu0 0.0
    %2250 = vmatpush1.msra.mxu0 0.0
    %2251 = vmatprep.subr.mxu0 0.0
    %2252 = vmatpush1.msra.mxu0 0.0
    %2253 = vmatprep.subr.mxu0 0.0
    %2254 = vmatpush1.msra.mxu0 0.0
    %2255 = vmatprep.subr.mxu0 0.0
    %2256 = vmatpush1.msra.mxu0 0.0
    %2257 = vmatprep.subr.mxu0 0.0
    %2258 = vmatpush1.msra.mxu0 0.0
    %2259 = vmatprep.subr.mxu0 0.0
    %2260 = vmatpush1.msra.mxu0 0.0
    %2261 = vmatprep.subr.mxu0 0.0
    %2262 = vmatpush1.msra.mxu0 0.0
    %2263 = vmatprep.subr.mxu0 0.0
    %2264 = vmatpush1.msra.mxu0 0.0
    %2265 = vmatprep.subr.mxu0 0.0
    %2266 = vmatpush1.msra.mxu0 0.0
    %2267 = vmatprep.subr.mxu0 0.0
    %2268 = vmatpush1.msra.mxu0 0.0
    %2269 = vmatprep.subr.mxu0 0.0
    %2270 = vmatpush1.msra.mxu0 0.0
    %2271 = vmatprep.subr.mxu0 0.0
    %2272 = vmatpush1.msra.mxu0 0.0
    %2273 = vmatprep.subr.mxu0 0.0
    %2274 = vmatpush1.msra.mxu0 0.0
    %2275 = vmatprep.subr.mxu0 0.0
    %2276 = vmatpush1.msra.mxu0 0.0
    %2277 = vmatprep.subr.mxu0 0.0
    %2278 = vmatpush1.msra.mxu0 0.0
    %2279 = vmatprep.subr.mxu0 0.0
    %2280 = vmatpush1.msra.mxu0 0.0
    %2281 = vmatprep.subr.mxu0 0.0
    %2282 = vmatpush1.msra.mxu0 0.0
    %2283 = vmatprep.subr.mxu0 0.0
    %2284 = vmatpush1.msra.mxu0 0.0
    %2285 = vmatprep.subr.mxu0 0.0
    %2286 = vmatpush1.msra.mxu0 0.0
    %2287 = vmatprep.subr.mxu0 0.0
    %2288 = vmatpush1.msra.mxu0 0.0
    %2289 = vmatprep.subr.mxu0 0.0
    %2290 = vmatpush1.msra.mxu0 0.0
    %2291 = vmatprep.mubr.f32.mxu0 0.0
    %v2292 = vand.u32 %v2040, 4294901760
    %v2293 = vsub.f32 %v2040, %v2292
    %2294 = vmatmul.mubr.f32.gmra.mrb[0].mxu0 %v2293
    %v2295 = vpop.f32.mrb[0].mxu0
    %v2296 = vadd.f32 %v2212, %v2295
    %v2297 = vpop.f32.mrb[0].mxu0
    %v2298 = vadd.f32 %v2214, %v2297
    %2299 = vmatprep.mubr.f32.mxu0 0.0
    %v2300 = vand.u32 %v2043, 4294901760
    %v2301 = vsub.f32 %v2043, %v2300
    %2302 = vmatmul.mubr.f32.gmra.mrb[0].mxu0 %v2301
    %v2303 = vpop.f32.mrb[0].mxu0
    %v2304 = vadd.f32 %v2219, %v2303
    %v2305 = vpop.f32.mrb[0].mxu0
    %v2306 = vadd.f32 %v2221, %v2305
    %2307 = vdwg.mxu0
    %v2308 = vand.u32 %v1512, 4294901760
    %2309 = vmatprep.subr.mxu0 %v2308
    %v2310 = vand.u32 %v1510, 4294901760
    %2311 = vmatpush1.msra.mxu0 %v2310
    %2312 = vmatprep.subr.mxu0 0.0
    %2313 = vmatpush1.msra.mxu0 0.0
    %2314 = vmatprep.subr.mxu0 0.0
    %2315 = vmatpush1.msra.mxu0 0.0
    %2316 = vmatprep.subr.mxu0 0.0
    %2317 = vmatpush1.msra.mxu0 0.0
    %2318 = vmatprep.subr.mxu0 0.0
    %2319 = vmatpush1.msra.mxu0 0.0
    %2320 = vmatprep.subr.mxu0 0.0
    %2321 = vmatpush1.msra.mxu0 0.0
    %2322 = vmatprep.subr.mxu0 0.0
    %2323 = vmatpush1.msra.mxu0 0.0
    %2324 = vmatprep.subr.mxu0 0.0
    %2325 = vmatpush1.msra.mxu0 0.0
    %2326 = vmatprep.subr.mxu0 0.0
    %2327 = vmatpush1.msra.mxu0 0.0
    %2328 = vmatprep.subr.mxu0 0.0
    %2329 = vmatpush1.msra.mxu0 0.0
    %2330 = vmatprep.subr.mxu0 0.0
    %2331 = vmatpush1.msra.mxu0 0.0
    %2332 = vmatprep.subr.mxu0 0.0
    %2333 = vmatpush1.msra.mxu0 0.0
    %2334 = vmatprep.subr.mxu0 0.0
    %2335 = vmatpush1.msra.mxu0 0.0
    %2336 = vmatprep.subr.mxu0 0.0
    %2337 = vmatpush1.msra.mxu0 0.0
    %2338 = vmatprep.subr.mxu0 0.0
    %2339 = vmatpush1.msra.mxu0 0.0
    %2340 = vmatprep.subr.mxu0 0.0
    %2341 = vmatpush1.msra.mxu0 0.0
    %2342 = vmatprep.subr.mxu0 0.0
    %2343 = vmatpush1.msra.mxu0 0.0
    %2344 = vmatprep.subr.mxu0 0.0
    %2345 = vmatpush1.msra.mxu0 0.0
    %2346 = vmatprep.subr.mxu0 0.0
    %2347 = vmatpush1.msra.mxu0 0.0
    %2348 = vmatprep.subr.mxu0 0.0
    %2349 = vmatpush1.msra.mxu0 0.0
    %2350 = vmatprep.subr.mxu0 0.0
    %2351 = vmatpush1.msra.mxu0 0.0
    %2352 = vmatprep.subr.mxu0 0.0
    %2353 = vmatpush1.msra.mxu0 0.0
    %2354 = vmatprep.subr.mxu0 0.0
    %2355 = vmatpush1.msra.mxu0 0.0
    %2356 = vmatprep.subr.mxu0 0.0
    %2357 = vmatpush1.msra.mxu0 0.0
    %2358 = vmatprep.subr.mxu0 0.0
    %2359 = vmatpush1.msra.mxu0 0.0
    %2360 = vmatprep.subr.mxu0 0.0
    %2361 = vmatpush1.msra.mxu0 0.0
    %2362 = vmatprep.subr.mxu0 0.0
    %2363 = vmatpush1.msra.mxu0 0.0
    %2364 = vmatprep.subr.mxu0 0.0
    %2365 = vmatpush1.msra.mxu0 0.0
    %2366 = vmatprep.subr.mxu0 0.0
    %2367 = vmatpush1.msra.mxu0 0.0
    %2368 = vmatprep.subr.mxu0 0.0
    %2369 = vmatpush1.msra.mxu0 0.0
    %2370 = vmatprep.subr.mxu0 0.0
    %2371 = vmatpush1.msra.mxu0 0.0
    %2372 = vmatprep.subr.mxu0 0.0
    %2373 = vmatpush1.msra.mxu0 0.0
    %2374 = vmatprep.mubr.f32.mxu0 0.0
    %v2375 = vand.u32 %v2040, 4294901760
    %v2376 = vsub.f32 %v2040, %v2375
    %v2377 = vand.u32 %v2376, 4294901760
    %2378 = vmatmul.mubr.f32.gmra.mrb[0].mxu0 %v2377
    %v2379 = vpop.f32.mrb[0].mxu0
    %v2380 = vadd.f32 %v2296, %v2379
    %v2381 = vpop.f32.mrb[0].mxu0
    %v2382 = vadd.f32 %v2298, %v2381
    %2383 = vmatprep.mubr.f32.mxu0 0.0
    %v2384 = vand.u32 %v2043, 4294901760
    %v2385 = vsub.f32 %v2043, %v2384
    %v2386 = vand.u32 %v2385, 4294901760
    %2387 = vmatmul.mubr.f32.gmra.mrb[0].mxu0 %v2386
    %v2388 = vpop.f32.mrb[0].mxu0
    %v2389 = vadd.f32 %v2304, %v2388
    %v2390 = vpop.f32.mrb[0].mxu0
    %v2391 = vadd.f32 %v2306, %v2390
    %2392 = vdwg.mxu0
    %v2393 = vand.u32 %v1512, 4294901760
    %v2394 = vsub.f32 %v1512, %v2393
    %v2395 = vand.u32 %v2394, 4294901760
    %2396 = vmatprep.subr.mxu0 %v2395
    %v2397 = vand.u32 %v1510, 4294901760
    %v2398 = vsub.f32 %v1510, %v2397
    %v2399 = vand.u32 %v2398, 4294901760
    %2400 = vmatpush1.msra.mxu0 %v2399
    %2401 = vmatprep.subr.mxu0 0.0
    %2402 = vmatpush1.msra.mxu0 0.0
    %2403 = vmatprep.subr.mxu0 0.0
    %2404 = vmatpush1.msra.mxu0 0.0
    %2405 = vmatprep.subr.mxu0 0.0
    %2406 = vmatpush1.msra.mxu0 0.0
    %2407 = vmatprep.subr.mxu0 0.0
    %2408 = vmatpush1.msra.mxu0 0.0
    %2409 = vmatprep.subr.mxu0 0.0
    %2410 = vmatpush1.msra.mxu0 0.0
    %2411 = vmatprep.subr.mxu0 0.0
    %2412 = vmatpush1.msra.mxu0 0.0
    %2413 = vmatprep.subr.mxu0 0.0
    %2414 = vmatpush1.msra.mxu0 0.0
    %2415 = vmatprep.subr.mxu0 0.0
    %2416 = vmatpush1.msra.mxu0 0.0
    %2417 = vmatprep.subr.mxu0 0.0
    %2418 = vmatpush1.msra.mxu0 0.0
    %2419 = vmatprep.subr.mxu0 0.0
    %2420 = vmatpush1.msra.mxu0 0.0
    %2421 = vmatprep.subr.mxu0 0.0
    %2422 = vmatpush1.msra.mxu0 0.0
    %2423 = vmatprep.subr.mxu0 0.0
    %2424 = vmatpush1.msra.mxu0 0.0
    %2425 = vmatprep.subr.mxu0 0.0
    %2426 = vmatpush1.msra.mxu0 0.0
    %2427 = vmatprep.subr.mxu0 0.0
    %2428 = vmatpush1.msra.mxu0 0.0
    %2429 = vmatprep.subr.mxu0 0.0
    %2430 = vmatpush1.msra.mxu0 0.0
    %2431 = vmatprep.subr.mxu0 0.0
    %2432 = vmatpush1.msra.mxu0 0.0
    %2433 = vmatprep.subr.mxu0 0.0
    %2434 = vmatpush1.msra.mxu0 0.0
    %2435 = vmatprep.subr.mxu0 0.0
    %2436 = vmatpush1.msra.mxu0 0.0
    %2437 = vmatprep.subr.mxu0 0.0
    %2438 = vmatpush1.msra.mxu0 0.0
    %2439 = vmatprep.subr.mxu0 0.0
    %2440 = vmatpush1.msra.mxu0 0.0
    %2441 = vmatprep.subr.mxu0 0.0
    %2442 = vmatpush1.msra.mxu0 0.0
    %2443 = vmatprep.subr.mxu0 0.0
    %2444 = vmatpush1.msra.mxu0 0.0
    %2445 = vmatprep.subr.mxu0 0.0
    %2446 = vmatpush1.msra.mxu0 0.0
    %2447 = vmatprep.subr.mxu0 0.0
    %2448 = vmatpush1.msra.mxu0 0.0
    %2449 = vmatprep.subr.mxu0 0.0
    %2450 = vmatpush1.msra.mxu0 0.0
    %2451 = vmatprep.subr.mxu0 0.0
    %2452 = vmatpush1.msra.mxu0 0.0
    %2453 = vmatprep.subr.mxu0 0.0
    %2454 = vmatpush1.msra.mxu0 0.0
    %2455 = vmatprep.subr.mxu0 0.0
    %2456 = vmatpush1.msra.mxu0 0.0
    %2457 = vmatprep.subr.mxu0 0.0
    %2458 = vmatpush1.msra.mxu0 0.0
    %2459 = vmatprep.subr.mxu0 0.0
    %2460 = vmatpush1.msra.mxu0 0.0
    %2461 = vmatprep.subr.mxu0 0.0
    %2462 = vmatpush1.msra.mxu0 0.0
    %2463 = vmatprep.mubr.f32.mxu0 0.0
    %v2464 = vand.u32 %v2040, 4294901760
    %2465 = vmatmul.mubr.f32.gmra.mrb[0].mxu0 %v2464
    %v2466 = vpop.f32.mrb[0].mxu0
    %v2467 = vadd.f32 %v2380, %v2466
    %v2468 = vpop.f32.mrb[0].mxu0
    %v2469 = vadd.f32 %v2382, %v2468
    %2470 = vmatprep.mubr.f32.mxu0 0.0
    %v2471 = vand.u32 %v2043, 4294901760
    %2472 = vmatmul.mubr.f32.gmra.mrb[0].mxu0 %v2471
    %v2473 = vpop.f32.mrb[0].mxu0
    %v2474 = vadd.f32 %v2389, %v2473
    %v2475 = vpop.f32.mrb[0].mxu0
    %v2476 = vadd.f32 %v2391, %v2475
    %2477 = vdwg.mxu0
    %v2478 = vand.u32 %v1512, 4294901760
    %2479 = vmatprep.subr.mxu0 %v2478
    %v2480 = vand.u32 %v1510, 4294901760
    %2481 = vmatpush1.msra.mxu0 %v2480
    %2482 = vmatprep.subr.mxu0 0.0
    %2483 = vmatpush1.msra.mxu0 0.0
    %2484 = vmatprep.subr.mxu0 0.0
    %2485 = vmatpush1.msra.mxu0 0.0
    %2486 = vmatprep.subr.mxu0 0.0
    %2487 = vmatpush1.msra.mxu0 0.0
    %2488 = vmatprep.subr.mxu0 0.0
    %2489 = vmatpush1.msra.mxu0 0.0
    %2490 = vmatprep.subr.mxu0 0.0
    %2491 = vmatpush1.msra.mxu0 0.0
    %2492 = vmatprep.subr.mxu0 0.0
    %2493 = vmatpush1.msra.mxu0 0.0
    %2494 = vmatprep.subr.mxu0 0.0
    %2495 = vmatpush1.msra.mxu0 0.0
    %2496 = vmatprep.subr.mxu0 0.0
    %2497 = vmatpush1.msra.mxu0 0.0
    %2498 = vmatprep.subr.mxu0 0.0
    %2499 = vmatpush1.msra.mxu0 0.0
    %2500 = vmatprep.subr.mxu0 0.0
    %2501 = vmatpush1.msra.mxu0 0.0
    %2502 = vmatprep.subr.mxu0 0.0
    %2503 = vmatpush1.msra.mxu0 0.0
    %2504 = vmatprep.subr.mxu0 0.0
    %2505 = vmatpush1.msra.mxu0 0.0
    %2506 = vmatprep.subr.mxu0 0.0
    %2507 = vmatpush1.msra.mxu0 0.0
    %2508 = vmatprep.subr.mxu0 0.0
    %2509 = vmatpush1.msra.mxu0 0.0
    %2510 = vmatprep.subr.mxu0 0.0
    %2511 = vmatpush1.msra.mxu0 0.0
    %2512 = vmatprep.subr.mxu0 0.0
    %2513 = vmatpush1.msra.mxu0 0.0
    %2514 = vmatprep.subr.mxu0 0.0
    %2515 = vmatpush1.msra.mxu0 0.0
    %2516 = vmatprep.subr.mxu0 0.0
    %2517 = vmatpush1.msra.mxu0 0.0
    %2518 = vmatprep.subr.mxu0 0.0
    %2519 = vmatpush1.msra.mxu0 0.0
    %2520 = vmatprep.subr.mxu0 0.0
    %2521 = vmatpush1.msra.mxu0 0.0
    %2522 = vmatprep.subr.mxu0 0.0
    %2523 = vmatpush1.msra.mxu0 0.0
    %2524 = vmatprep.subr.mxu0 0.0
    %2525 = vmatpush1.msra.mxu0 0.0
    %2526 = vmatprep.subr.mxu0 0.0
    %2527 = vmatpush1.msra.mxu0 0.0
    %2528 = vmatprep.subr.mxu0 0.0
    %2529 = vmatpush1.msra.mxu0 0.0
    %2530 = vmatprep.subr.mxu0 0.0
    %2531 = vmatpush1.msra.mxu0 0.0
    %2532 = vmatprep.subr.mxu0 0.0
    %2533 = vmatpush1.msra.mxu0 0.0
    %2534 = vmatprep.subr.mxu0 0.0
    %2535 = vmatpush1.msra.mxu0 0.0
    %2536 = vmatprep.subr.mxu0 0.0
    %2537 = vmatpush1.msra.mxu0 0.0
    %2538 = vmatprep.subr.mxu0 0.0
    %2539 = vmatpush1.msra.mxu0 0.0
    %2540 = vmatprep.subr.mxu0 0.0
    %2541 = vmatpush1.msra.mxu0 0.0
    %2542 = vmatprep.subr.mxu0 0.0
    %2543 = vmatpush1.msra.mxu0 0.0
    %2544 = vmatprep.mubr.f32.mxu0 0.0
    %v2545 = vand.u32 %v2040, 4294901760
    %2546 = vmatmul.mubr.f32.gmra.mrb[0].mxu0 %v2545
    %v2547 = vpop.f32.mrb[0].mxu0
    %v2548 = vadd.f32 %v2467, %v2547
    %v2549 = vpop.f32.mrb[0].mxu0
    %v2550 = vadd.f32 %v2469, %v2549
    %2551 = vmatprep.mubr.f32.mxu0 0.0
    %v2552 = vand.u32 %v2043, 4294901760
    %2553 = vmatmul.mubr.f32.gmra.mrb[0].mxu0 %v2552
    %v2554 = vpop.f32.mrb[0].mxu0
    %v2555 = vadd.f32 %v2474, %v2554
    %v2556 = vpop.f32.mrb[0].mxu0
    %v2557 = vadd.f32 %v2476, %v2556
    %2558 = vdwg.mxu0
    %2559 = vst [vmem:[#allocation2] sm:$0xff] %v2548
    %2560 = vst [vmem:[#allocation2 + $0x8] sm:$0xff] %v2550
    %2561 = vst [vmem:[#allocation2 + $0x10] sm:$0xff] %v2555
    %2562 = vst [vmem:[#allocation2 + $0x18] sm:$0xff] %v2557
    // Predicated region
    $region22: #{tpu_custom_call.1} parent=1 // pred_check
      _
    $region23: #{tpu_custom_call.1} parent=1 // pred_check_branch
      %2564 = sbr.rel (0) target = $region25
    $region24: #{tpu_custom_call.1} parent=1 // pred_region
      %s2566 = ssub.s32 512, 512
      %2567 = vsyncadd [#allocation3], %s2566
      %s2568 = sshll.u32 [#allocation2], 4
      %s2569 = int_to_ptr.vmem [resolvable:$true] %s2568
      %2574 = dma.vmem_to_hbm [thread:$0]  %s2569, 512, %s5, [#allocation3], 256, 256, 16
    $region25: #{tpu_custom_call.1} parent=1 // pred_fallthru
      _
    // Predicated region
    $region26: #{tpu_custom_call.1} parent=1 // pred_check
      _
    $region27: #{tpu_custom_call.1} parent=1 // pred_check_branch
      %2576 = sbr.rel (0) target = $region29
    $region28: #{tpu_custom_call.1} parent=1 // pred_region
      %2577 = dma.done [#allocation3], 512
    $region29: #{tpu_custom_call.1} parent=1 // pred_fallthru
      _
    %2578 = vsyncpa [#allocation3], 1

</llo_original>
